<compile_context>
chip_gen: v6e
topology: v6e:2x2x1
jax: 0.10.0
libtpu: 0.0.40
codegen_flags: <defaults>
</compile_context>

<pallas_src>
import functools

import jax
import jax.numpy as jnp
from jax import lax
from jax.experimental import pallas as pl
from jax.experimental.pallas import tpu as pltpu


def _round_up(a, m):
    return (a + m - 1) // m * m


def _tpu_vmem_bytes():
    try:
        return int(pltpu.get_tpu_info().vmem_capacity_bytes)
    except Exception:
        return 64 * 1024 * 1024          # conservative (v7x-sized) fallback


_BIG_VMEM = _tpu_vmem_bytes() >= 100 * 1024 * 1024     # v5e / v6e (128 MiB VMEM)
_TCO_MAX = 512 if _BIG_VMEM else 256
_VMEM_LIMIT = (96 if _BIG_VMEM else 48) * 1024 * 1024


# ----------------------------------------------------------------------------
# 3x3 convolution (stride 1, padding 1) + bias + optional ReLU — shift kernel
# ----------------------------------------------------------------------------
def _conv3x3_shift_kernel(x_ref, w_ref, b_ref, o_ref, acc_ref, *, H, Wp, apply_relu):
    # x_ref:   (1, 3, Ls, Cin)  dx-shifted flattened padded image slabs (bf16)
    # w_ref:   (9, Cin, TCo)    weights, tap-major (bf16)
    # b_ref:   (1, TCo)         bias (f32)
    # o_ref:   (1, M, TCo)      flat output slab, M = H*Wp (bf16)
    # acc_ref: (M, TCo)         f32 accumulator scratch
    M = H * Wp

    def tap(dy, dx):
        base = dy * Wp                       # multiple of 8 -> aligned sublane start
        return jnp.dot(x_ref[0, dx, base:base + M, :], w_ref[3 * dy + dx],
                       preferred_element_type=jnp.float32)

    # dy = 0 group: direct write, bias folded in (no zeros init / extra bias pass).
    acc_ref[...] = b_ref[...] + tap(0, 0) + tap(0, 1) + tap(0, 2)
    # dy = 1, 2 groups: one accumulator read-modify-write each.
    acc_ref[...] += tap(1, 0) + tap(1, 1) + tap(1, 2)
    acc_ref[...] += tap(2, 0) + tap(2, 1) + tap(2, 2)

    res = acc_ref[...]
    if apply_relu:
        res = jnp.maximum(res, 0.0)
    o_ref[0] = res.astype(o_ref.dtype)       # single lane-dense slab store


def _conv3x3_shift(x, w, b, apply_relu=True):
    # x: (N, H, W, Cin) ; w: (3, 3, Cin, Cout) ; b: (Cout,)
    N, H, W, Cin = x.shape
    Cout = w.shape[-1]
    Wp = _round_up(W + 2, 8)                  # padded width, multiple of 8
    Hp = H + 3                                # 1 top + 2 bottom zero rows
    M = H * Wp
    Ls = (H + 2) * Wp

    xp = jnp.pad(x.astype(jnp.bfloat16),
                 ((0, 0), (1, Hp - H - 1), (1, Wp - W - 1), (0, 0)))
    xf = xp.reshape(N, Hp * Wp, Cin)          # free row-major reshape
    # Pre-materialize the 3 dx-shifted copies so every tap slice is 8-aligned.
    x3 = jnp.stack([xf[:, dx:dx + Ls, :] for dx in range(3)], axis=1)  # (N,3,Ls,Cin)

    w9 = w.reshape(9, Cin, Cout).astype(jnp.bfloat16)
    b2 = b.reshape(1, Cout).astype(jnp.float32)

    tco = min(Cout, _TCO_MAX)
    kernel = functools.partial(_conv3x3_shift_kernel, H=H, Wp=Wp, apply_relu=apply_relu)
    out_flat = pl.pallas_call(
        kernel,
        out_shape=jax.ShapeDtypeStruct((N, M, Cout), jnp.bfloat16),
        grid=(N, Cout // tco),
        in_specs=[
            pl.BlockSpec((1, 3, Ls, Cin), lambda n, co: (n, 0, 0, 0)),  # resident per n
            pl.BlockSpec((9, Cin, tco), lambda n, co: (0, 0, co)),
            pl.BlockSpec((1, tco), lambda n, co: (0, co)),
        ],
        out_specs=pl.BlockSpec((1, M, tco), lambda n, co: (n, 0, co)),
        scratch_shapes=[pltpu.VMEM((M, tco), jnp.float32)],
        compiler_params=pltpu.CompilerParams(
            dimension_semantics=("parallel", "parallel"),
            vmem_limit_bytes=_VMEM_LIMIT),
    )(x3, w9, b2)

    # Drop the Wp-W garbage columns of every flat row (wrapper-side).
    return out_flat.reshape(N, H, Wp, Cout)[:, :, :W, :]


# ----------------------------------------------------------------------------
# Small-Cin path (conv1_1): im2col -> one K = 9*Cin GEMM
# ----------------------------------------------------------------------------
def _gemm_bias_kernel(x_ref, w_ref, b_ref, o_ref, *, apply_relu):
    # x_ref: (1, M, K) ; w_ref: (K, Cout) ; b_ref: (1, Cout) ; o_ref: (1, M, Cout)
    res = b_ref[...] + jnp.dot(x_ref[0], w_ref[...],
                               preferred_element_type=jnp.float32)
    if apply_relu:
        res = jnp.maximum(res, 0.0)
    o_ref[0] = res.astype(o_ref.dtype)


def _conv3x3_im2col(x, w, b, apply_relu=True):
    N, H, W, Cin = x.shape
    Cout = w.shape[-1]
    K = 9 * Cin
    xp = jnp.pad(x.astype(jnp.bfloat16), ((0, 0), (1, 1), (1, 1), (0, 0)))
    cols = [xp[:, dy:dy + H, dx:dx + W, :] for dy in range(3) for dx in range(3)]
    patches = jnp.concatenate(cols, axis=-1).reshape(N, H * W, K)   # (dy,dx,cin) order
    wf = w.reshape(K, Cout).astype(jnp.bfloat16)                    # same order
    b2 = b.reshape(1, Cout).astype(jnp.float32)

    kernel = functools.partial(_gemm_bias_kernel, apply_relu=apply_relu)
    out = pl.pallas_call(
        kernel,
        out_shape=jax.ShapeDtypeStruct((N, H * W, Cout), jnp.bfloat16),
        grid=(N,),
        in_specs=[
            pl.BlockSpec((1, H * W, K), lambda n: (n, 0, 0)),
            pl.BlockSpec((K, Cout), lambda n: (0, 0)),
            pl.BlockSpec((1, Cout), lambda n: (0, 0)),
        ],
        out_specs=pl.BlockSpec((1, H * W, Cout), lambda n: (n, 0, 0)),
        compiler_params=pltpu.CompilerParams(
            dimension_semantics=("parallel",),
            vmem_limit_bytes=_VMEM_LIMIT),
    )(patches, wf, b2)
    return out.reshape(N, H, W, Cout)


def conv3x3(x, w, b, apply_relu=True):
    if x.shape[-1] < 8:                       # conv1_1 (Cin=3)
        return _conv3x3_im2col(x, w, b, apply_relu)
    return _conv3x3_shift(x, w, b, apply_relu)


# ----------------------------------------------------------------------------
# 2x2 max pool, stride 2 — whole image per grid step
# ----------------------------------------------------------------------------
def _maxpool2_kernel(x_ref, o_ref):
    # x_ref: (1, Ho, 2, Wo, 2C) — (even,odd) rows on axis 2, (even,odd) cols on lanes
    # o_ref: (1, Ho, Wo, C)
    C = o_ref.shape[-1]
    x = x_ref[...]
    v = jnp.maximum(x[0, :, 0], x[0, :, 1])            # vertical max  (Ho, Wo, 2C)
    o_ref[0] = jnp.maximum(v[:, :, :C], v[:, :, C:])   # horizontal max


def maxpool2x2(x):
    N, H, W, C = x.shape
    Ho, Wo = H // 2, W // 2
    xr = x.reshape(N, Ho, 2, Wo, 2 * C)       # free reshape (row-major)
    return pl.pallas_call(
        _maxpool2_kernel,
        out_shape=jax.ShapeDtypeStruct((N, Ho, Wo, C), x.dtype),
        grid=(N,),
        in_specs=[pl.BlockSpec((1, Ho, 2, Wo, 2 * C), lambda n: (n, 0, 0, 0, 0))],
        out_specs=pl.BlockSpec((1, Ho, Wo, C), lambda n: (n, 0, 0, 0)),
        compiler_params=pltpu.CompilerParams(
            dimension_semantics=("parallel",)),
    )(xr)


# ----------------------------------------------------------------------------
# Pure-JAX reference (same bf16 pipeline, for the correctness check)
# ----------------------------------------------------------------------------
def conv3x3_ref(x, w, b, apply_relu=True):
    y = lax.conv_general_dilated(
        x.astype(jnp.bfloat16), w.astype(jnp.bfloat16),
        window_strides=(1, 1), padding="SAME",
        dimension_numbers=("NHWC", "HWIO", "NHWC"),
        preferred_element_type=jnp.float32) + b
    if apply_relu:
        y = jnp.maximum(y, 0.0)
    return y.astype(jnp.bfloat16)


def maxpool2x2_ref(x):
    N, H, W, C = x.shape
    return x.reshape(N, H // 2, 2, W // 2, 2, C).max(axis=(2, 4))


# ----------------------------------------------------------------------------
# Vgg16 parameters & forward (same branching semantics as the PyTorch module)
# ----------------------------------------------------------------------------
VGG_CFG = [
    ("conv1_1", 3, 64), ("conv1_2", 64, 64),
    ("conv2_1", 64, 128), ("conv2_2", 128, 128),
    ("conv3_1", 128, 256), ("conv3_2", 256, 256), ("conv3_3", 256, 256),
    ("conv4_1", 256, 512), ("conv4_2", 512, 512), ("conv4_3", 512, 512),
    ("conv5_1", 512, 512), ("conv5_2", 512, 512), ("conv5_3", 512, 512),
]


def init_params(key):
    params = {}
    for name, cin, cout in VGG_CFG:
        key, kw, kb = jax.random.split(key, 3)
        w = (jax.random.normal(kw, (3, 3, cin, cout), jnp.float32)
             * jnp.sqrt(2.0 / (9.0 * cin))).astype(jnp.bfloat16)
        b = jax.random.normal(kb, (cout,), jnp.float32) * 0.01
        params[name] = (w, b)
    return params


class Opt:
    def __init__(self, vgg_choose="relu5_3", vgg_maxpooling=False):
        self.vgg_choose = vgg_choose
        self.vgg_maxpooling = vgg_maxpooling


def vgg16_forward(params, X_nchw, opt, conv=conv3x3, pool=maxpool2x2):
    x = jnp.transpose(X_nchw, (0, 2, 3, 1))              # NCHW -> NHWC
    h = conv(x, *params["conv1_1"])
    h = conv(h, *params["conv1_2"])
    h = pool(h)
    h = conv(h, *params["conv2_1"])
    h = conv(h, *params["conv2_2"])
    h = pool(h)
    h = conv(h, *params["conv3_1"])
    h = conv(h, *params["conv3_2"])
    h = conv(h, *params["conv3_3"])
    if opt.vgg_choose != "no_maxpool":
        h = pool(h)
    h = conv(h, *params["conv4_1"]); relu4_1 = h
    h = conv(h, *params["conv4_2"]); relu4_2 = h
    # Only materialize the pre-ReLU tensor when it is actually returned;
    # otherwise fuse the ReLU into the conv epilogue (no extra HBM pass).
    if opt.vgg_choose == "conv4_3":
        conv4_3 = conv(h, *params["conv4_3"], apply_relu=False)
        relu4_3 = jnp.maximum(conv4_3, 0).astype(conv4_3.dtype)
    else:
        conv4_3 = None
        relu4_3 = conv(h, *params["conv4_3"])
    h = relu4_3
    if opt.vgg_choose != "no_maxpool" and opt.vgg_maxpooling:
        h = pool(h)
    relu5_1 = conv(h, *params["conv5_1"])
    relu5_2 = conv(relu5_1, *params["conv5_2"])
    if opt.vgg_choose == "conv5_3":
        conv5_3 = conv(relu5_2, *params["conv5_3"], apply_relu=False)
        relu5_3 = jnp.maximum(conv5_3, 0).astype(conv5_3.dtype)
    else:
        conv5_3 = None
        relu5_3 = conv(relu5_2, *params["conv5_3"])

    if opt.vgg_choose == "conv4_3":
        out = conv4_3
    elif opt.vgg_choose == "relu4_2":
        out = relu4_2
    elif opt.vgg_choose == "relu4_1":
        out = relu4_1
    elif opt.vgg_choose == "relu4_3":
        out = relu4_3
    elif opt.vgg_choose == "conv5_3":
        out = conv5_3
    elif opt.vgg_choose == "relu5_1":
        out = relu5_1
    elif opt.vgg_choose == "relu5_2":
        out = relu5_2
    else:  # matches PyTorch's `== 'relu5_3' or 'maxpool'` (always truthy)
        out = relu5_3
    return jnp.transpose(out, (0, 3, 1, 2)).astype(jnp.float32)   # NHWC -> NCHW


if __name__ == "__main__":
    key = jax.random.PRNGKey(0)
    kx, kp = jax.random.split(key)
    N, C, H, W = 2, 3, 32, 32                              # small NCHW input
    x = jax.random.normal(kx, (N, C, H, W), jnp.float32)
    params = init_params(kp)
    opt = Opt(vgg_choose="relu5_3", vgg_maxpooling=False)

    out = jax.block_until_ready(vgg16_forward(params, x, opt))          # Pallas
    ref = jax.block_until_ready(
        vgg16_forward(params, x, opt, conv=conv3x3_ref, pool=maxpool2x2_ref))

    assert out.shape == ref.shape, (out.shape, ref.shape)
    num = float(jnp.linalg.norm((out - ref).astype(jnp.float32)))
    den = float(jnp.linalg.norm(ref.astype(jnp.float32))) + 1e-6
    rel = num / den
    if rel > 3e-2:
        raise AssertionError(f"mismatch: relative error {rel:.4e}")
    print("KERNEL_OK")
</pallas_src>

<mosaic_0001>
module attributes {stable_mosaic.version = 11 : i64} {
  func.func @_gemm_bias_kernel(%arg0: i32, %arg1: memref<1x1024x27xbf16, #tpu.memory_space<vmem>>, %arg2: memref<27x64xbf16, #tpu.memory_space<vmem>>, %arg3: memref<1x64xf32, #tpu.memory_space<vmem>>, %arg4: memref<1x1024x64xbf16, #tpu.memory_space<vmem>>) attributes {dimension_semantics = [#tpu.dimension_semantics<parallel>], iteration_bounds = array<i64: 2>, scalar_prefetch = 0 : i64, scratch_operands = 0 : i64, tpu.core_type = #tpu.core_type<tc>, window_params = [{transform_indices = @transform_0, window_bounds = array<i64: 1, 1024, 27>}, {pipeline_mode = #tpu.pipeline_mode<synchronous>, transform_indices = @transform_1, window_bounds = array<i64: 27, 64>}, {pipeline_mode = #tpu.pipeline_mode<synchronous>, transform_indices = @transform_2, window_bounds = array<i64: 1, 64>}, {transform_indices = @transform_3, window_bounds = array<i64: 1, 1024, 64>}]} {
    %c0 = arith.constant 0 : index
    %c0_0 = arith.constant 0 : index
    %0 = vector.load %arg3[%c0, %c0_0] : memref<1x64xf32, #tpu.memory_space<vmem>>, vector<1x64xf32>
    %c0_1 = arith.constant 0 : index
    %c0_2 = arith.constant 0 : index
    %c0_3 = arith.constant 0 : index
    %1 = vector.load %arg1[%c0_1, %c0_2, %c0_3] : memref<1x1024x27xbf16, #tpu.memory_space<vmem>>, vector<1x1024x27xbf16>
    %2 = vector.shape_cast %1 : vector<1x1024x27xbf16> to vector<1024x27xbf16>
    %c0_4 = arith.constant 0 : index
    %c0_5 = arith.constant 0 : index
    %3 = vector.load %arg2[%c0_4, %c0_5] : memref<27x64xbf16, #tpu.memory_space<vmem>>, vector<27x64xbf16>
    %cst = arith.constant dense<0.000000e+00> : vector<1024x64xf32>
    %4 = tpu.matmul %2, %3, %cst {dimension_numbers = #tpu.dot_dimension_numbers<[1], [0], [0], [1], [0, 0, 1, 1], [], []>} : vector<1024x27xbf16>, vector<27x64xbf16>, vector<1024x64xf32> -> vector<1024x64xf32>
    %5 = vector.broadcast %0 : vector<1x64xf32> to vector<1024x64xf32>
    %6 = arith.addf %5, %4 : vector<1024x64xf32>
    %cst_6 = arith.constant 0.000000e+00 : f32
    %7 = vector.broadcast %cst_6 : f32 to vector<1024x64xf32>
    %8 = arith.maximumf %6, %7 : vector<1024x64xf32>
    %9 = arith.truncf %8 : vector<1024x64xf32> to vector<1024x64xbf16>
    %c0_7 = arith.constant 0 : index
    %c0_8 = arith.constant 0 : index
    %c0_9 = arith.constant 0 : index
    %10 = vector.load %arg4[%c0_7, %c0_8, %c0_9] : memref<1x1024x64xbf16, #tpu.memory_space<vmem>>, vector<1x1024x64xbf16>
    %11 = vector.shape_cast %10 : vector<1x1024x64xbf16> to vector<1024x64xbf16>
    %12 = vector.shape_cast %9 : vector<1024x64xbf16> to vector<1x1024x64xbf16>
    tpu.vector_store %arg4[%c0_7, %c0_8, %c0_9], %12 {strides = array<i32>} : memref<1x1024x64xbf16, #tpu.memory_space<vmem>>, vector<1x1024x64xbf16>,
    return
  }
  func.func @transform_0(%arg0: i32) -> (i32, i32, i32) {
    %c0_i32 = arith.constant 0 : i32
    %c0_i32_0 = arith.constant 0 : i32
    %c0_i32_1 = arith.constant 0 : i32
    return %arg0, %c0_i32, %c0_i32_0 : i32, i32, i32
  }
  func.func @transform_1(%arg0: i32) -> (i32, i32) {
    %c0_i32 = arith.constant 0 : i32
    %c0_i32_0 = arith.constant 0 : i32
    %c0_i32_1 = arith.constant 0 : i32
    return %c0_i32, %c0_i32_0 : i32, i32
  }
  func.func @transform_2(%arg0: i32) -> (i32, i32) {
    %c0_i32 = arith.constant 0 : i32
    %c0_i32_0 = arith.constant 0 : i32
    %c0_i32_1 = arith.constant 0 : i32
    return %c0_i32, %c0_i32_0 : i32, i32
  }
  func.func @transform_3(%arg0: i32) -> (i32, i32, i32) {
    %c0_i32 = arith.constant 0 : i32
    %c0_i32_0 = arith.constant 0 : i32
    %c0_i32_1 = arith.constant 0 : i32
    return %arg0, %c0_i32, %c0_i32_0 : i32, i32, i32
  }
}

</mosaic_0001>

<llo_original>
// kernel: tpu_custom_call.1
$region0: #{tpu_custom_call.1}
  #allocation0 [shape = 'u32[]', space=smem, size = 0x4, offset = 0x4, fixed_abs, tag = 'smem constant byte address 0x4 - core index']
  #allocation1 [shape = 'u32[144,128]{1,0:T(1,128)}', space=vmem, size = 0x12000, scoped, tag = 'internal scratch']
  %s0 = inlined_call_operand.vmem [shape: bf16[2,1024,27], index: 0, kind: input, shape index: {}]
  %s1 = inlined_call_operand.vmem [shape: bf16[27,64], index: 1, kind: input, shape index: {}]
  %s2 = inlined_call_operand.vmem [shape: f32[1,64], index: 2, kind: input, shape index: {}]
  %s3 = inlined_call_operand.vmem [shape: bf16[2,1024,64], index: 3, kind: output, shape index: {}]
  %s4 = sld [smem:[#allocation0]]
  $region45: #{tpu_custom_call.1} parent=0
    _
  %s6 = ssub.s32 1, %s4
  %s7 = scalar_select 0, %s6, %s4
  loop: start=0, step=1, limit=4
  $region2: #{tpu_custom_call.1} parent=0 // loop_pre_header
    _
  $region3: #{tpu_custom_call.1} parent=0 // loop_header
    %s9 = sphi 0, %s13
    %p10 = scmp.ge.s32.totalorder %s9, 4
    %s19 = sphi 0, %s21
    %s22 = sphi 0, %s19
    %s23 = sphi 0, %s22
    %s39 = sphi 0, %s23
    %s43 = sphi 0, %s43
    %s45 = sphi 0, %s43
    %s46 = sphi 0, %s45
    %s60 = sphi 0, %s46
    %s64 = sphi 0, %s64
    %s66 = sphi 0, %s64
    %s67 = sphi 0, %s66
    %s81 = sphi 0, %s67
    %s87 = sphi 0, %s89
    %s90 = sphi 0, %s87
    %s91 = sphi 0, %s90
    %s107 = sphi 0, %s91
  $region4: #{tpu_custom_call.1} parent=0 // loop_header_branch
    %12 = sbr.rel (%p10) target = $region8
  $region5: #{tpu_custom_call.1} parent=0 // loop_body
    %s14 = ssub.s32 %s9, 1
    %s15 = ssub.s32 %s9, 2
    %s16 = sadd.s32 %s9, 1
    %s17 = ssub.s32 %s9, %s16
    %p18 = scmp.eq.s32.totalorder %s17, 0
    %s20 = sadd.s32 %s19, 1
    %s21 = scalar_select %p18, %s19, %s20
    %p24 = pneg %p18
    %p25 = scmp.eq.s32.totalorder %s9, 1
    %p26 = por %p24, %p25
    %p27 = scmp.ne.s32.totalorder %s19, %s22
    %p28 = scmp.eq.s32.totalorder %s9, 0
    %p29 = por %p27, %p28
    %p30 = scmp.ne.s32.totalorder %s19, %s22
    %p31 = scmp.eq.s32.totalorder %s14, 1
    %p32 = por %p30, %p31
    %p33 = scmp.ne.s32.totalorder %s22, %s23
    %p34 = scmp.eq.s32.totalorder %s14, 0
    %p35 = por %p33, %p34
    %p36 = scmp.ne.s32.totalorder %s22, %s23
    %p37 = scmp.eq.s32.totalorder %s15, 1
    %p38 = por %p36, %p37
    %p40 = scmp.ne.s32.totalorder %s23, %s39
    %p41 = scmp.eq.s32.totalorder %s15, 0
    %p42 = por %p40, %p41
    %s44 = sadd.s32 %s43, 1
    %p47 = scmp.eq.s32.totalorder %s9, 1
    %p48 = scmp.ne.s32.totalorder %s43, %s45
    %p49 = scmp.eq.s32.totalorder %s9, 0
    %p50 = por %p48, %p49
    %p51 = scmp.ne.s32.totalorder %s43, %s45
    %p52 = scmp.eq.s32.totalorder %s14, 1
    %p53 = por %p51, %p52
    %p54 = scmp.ne.s32.totalorder %s45, %s46
    %p55 = scmp.eq.s32.totalorder %s14, 0
    %p56 = por %p54, %p55
    %p57 = scmp.ne.s32.totalorder %s45, %s46
    %p58 = scmp.eq.s32.totalorder %s15, 1
    %p59 = por %p57, %p58
    %p61 = scmp.ne.s32.totalorder %s46, %s60
    %p62 = scmp.eq.s32.totalorder %s15, 0
    %p63 = por %p61, %p62
    %s65 = sadd.s32 %s64, 1
    %p68 = scmp.eq.s32.totalorder %s9, 1
    %p69 = scmp.ne.s32.totalorder %s64, %s66
    %p70 = scmp.eq.s32.totalorder %s9, 0
    %p71 = por %p69, %p70
    %p72 = scmp.ne.s32.totalorder %s64, %s66
    %p73 = scmp.eq.s32.totalorder %s14, 1
    %p74 = por %p72, %p73
    %p75 = scmp.ne.s32.totalorder %s66, %s67
    %p76 = scmp.eq.s32.totalorder %s14, 0
    %p77 = por %p75, %p76
    %p78 = scmp.ne.s32.totalorder %s66, %s67
    %p79 = scmp.eq.s32.totalorder %s15, 1
    %p80 = por %p78, %p79
    %p82 = scmp.ne.s32.totalorder %s67, %s81
    %p83 = scmp.eq.s32.totalorder %s15, 0
    %p84 = por %p82, %p83
    %s85 = ssub.s32 %s9, %s16
    %p86 = scmp.eq.s32.totalorder %s85, 0
    %s88 = sadd.s32 %s87, 1
    %s89 = scalar_select %p86, %s87, %s88
    %p92 = pneg %p86
    %p93 = scmp.eq.s32.totalorder %s9, 1
    %p94 = por %p92, %p93
    %p95 = scmp.ne.s32.totalorder %s87, %s90
    %p96 = scmp.eq.s32.totalorder %s9, 0
    %p97 = por %p95, %p96
    %p98 = scmp.ne.s32.totalorder %s87, %s90
    %p99 = scmp.eq.s32.totalorder %s14, 1
    %p100 = por %p98, %p99
    %p101 = scmp.ne.s32.totalorder %s90, %s91
    %p102 = scmp.eq.s32.totalorder %s14, 0
    %p103 = por %p101, %p102
    %p104 = scmp.ne.s32.totalorder %s90, %s91
    %p105 = scmp.eq.s32.totalorder %s15, 1
    %p106 = por %p104, %p105
    %p108 = scmp.ne.s32.totalorder %s91, %s107
    %p109 = scmp.eq.s32.totalorder %s15, 0
    %p110 = por %p108, %p109
    %p111 = scmp.le.s32.totalorder 1, %s9
    %p112 = scmp.lt.s32.totalorder %s9, 3
    %p113 = pnand %p111, %p112
    %p114 = pneg %p113
    // Predicated region
    $region9: #{tpu_custom_call.1} parent=5 // pred_check
      _
    $region10: #{tpu_custom_call.1} parent=5 // pred_check_branch
      %116 = sbr.rel (%p113) target = $region12
    $region11: #{tpu_custom_call.1} parent=5 // pred_region
      %s117 = ssub.s32 %s9, 1
      // Predicated region
      $region13: #{tpu_custom_call.1} parent=11 // pred_check
        %p118 = pneg %p56
      $region14: #{tpu_custom_call.1} parent=11 // pred_check_branch
        %120 = sbr.rel (%p118) target = $region16
      $region15: #{tpu_custom_call.1} parent=11 // pred_region
        _
      $region16: #{tpu_custom_call.1} parent=11 // pred_fallthru
        _
      // Predicated region
      $region17: #{tpu_custom_call.1} parent=11 // pred_check
        %p121 = pneg %p77
      $region18: #{tpu_custom_call.1} parent=11 // pred_check_branch
        %123 = sbr.rel (%p121) target = $region20
      $region19: #{tpu_custom_call.1} parent=11 // pred_region
        _
      $region20: #{tpu_custom_call.1} parent=11 // pred_fallthru
        _
    $region12: #{tpu_custom_call.1} parent=5 // pred_fallthru
      _
    %p124 = scmp.lt.s32.totalorder %s9, 2
    // Predicated region
    $region21: #{tpu_custom_call.1} parent=5 // pred_check
      %p125 = pneg %p124
    $region22: #{tpu_custom_call.1} parent=5 // pred_check_branch
      %127 = sbr.rel (%p125) target = $region24
    $region23: #{tpu_custom_call.1} parent=5 // pred_region
      // Predicated region
      $region25: #{tpu_custom_call.1} parent=23 // pred_check
        %p128 = pneg %p29
      $region26: #{tpu_custom_call.1} parent=23 // pred_check_branch
        %130 = sbr.rel (%p128) target = $region28
      $region27: #{tpu_custom_call.1} parent=23 // pred_region
        %p131 = scmp.lt.s32.totalorder %s9, 1
        %s132 = scalar_select %p131, %s9, 1
        %s133 = smul.addr %s132, 128
        %s134 = smul.addr %s133, 4
        %s135 = scalar_lea.vmem %s0, %s134
      $region28: #{tpu_custom_call.1} parent=23 // pred_fallthru
        _
    $region24: #{tpu_custom_call.1} parent=5 // pred_fallthru
      _
    %p136 = scmp.le.s32.totalorder 1, %s9
    %p137 = scmp.lt.s32.totalorder %s9, 3
    %p138 = pnand %p136, %p137
    %p139 = pneg %p138
    // Predicated region
    $region29: #{tpu_custom_call.1} parent=5 // pred_check
      _
    $region30: #{tpu_custom_call.1} parent=5 // pred_check_branch
      %141 = sbr.rel (%p138) target = $region32
    $region31: #{tpu_custom_call.1} parent=5 // pred_region
      %s142 = ssub.s32 %s9, 1
      %p143 = scmp.lt.s32.totalorder %s14, 1
      %s144 = scalar_select %p143, %s14, 1
      %s145 = smul.addr %s144, 128
      %s146 = smul.addr %s145, 4
      %s147 = scalar_lea.vmem %s0, %s146
      %p148 = pneg %p35
      %p149 = pneg %p32
      %p150 = pneg %p56
      %p151 = pneg %p53
      %p152 = pneg %p77
      %p153 = pneg %p74
      %p154 = pneg %p103
      %p155 = pneg %p100
      %p156 = scmp.lt.s32.totalorder %s14, 1
      %s157 = scalar_select %p156, %s14, 1
      %s158 = smul.addr %s157, 128
      %s159 = smul.addr %s158, 4
      %s160 = scalar_lea.vmem %s3, %s159
      %p161 = scmp.lt.s32.totalorder %s14, 1
      %s162 = scalar_select %p161, %s14, 1
      %s163 = smul.addr %s162, 128
      %s164 = smul.addr %s163, 4
      %s165 = scalar_lea.vmem %s0, %s164
      %p166 = scmp.lt.s32.totalorder %s14, 1
      %s167 = scalar_select %p166, %s14, 1
      %s168 = smul.addr %s167, 128
      %s169 = smul.addr %s168, 4
      %s170 = scalar_lea.vmem %s3, %s169
      %v172 = vld [vmem:[%s2] sm:$0x1]
      %v173 = vld [vmem:[%s165] sm:$0xf]
      %v174 = vld [vmem:[%s165 + $0x4] sm:$0xf]
      %v175 = vld [vmem:[%s165 + $0x8] sm:$0xf]
      %v176 = vld [vmem:[%s165 + $0xc] sm:$0xf]
      %v177 = vld [vmem:[%s165 + $0x10] sm:$0xf]
      %v178 = vld [vmem:[%s165 + $0x14] sm:$0xf]
      %v179 = vld [vmem:[%s165 + $0x18] sm:$0xf]
      %v180 = vld [vmem:[%s165 + $0x1c] sm:$0xf]
      %v181 = vld [vmem:[%s165 + $0x20] sm:$0xf]
      %v182 = vld [vmem:[%s165 + $0x24] sm:$0xf]
      %v183 = vld [vmem:[%s165 + $0x28] sm:$0xf]
      %v184 = vld [vmem:[%s165 + $0x2c] sm:$0xf]
      %v185 = vld [vmem:[%s165 + $0x30] sm:$0xf]
      %v186 = vld [vmem:[%s165 + $0x34] sm:$0xf]
      %v187 = vld [vmem:[%s165 + $0x38] sm:$0xf]
      %v188 = vld [vmem:[%s165 + $0x3c] sm:$0xf]
      %v189 = vld [vmem:[%s165 + $0x40] sm:$0xf]
      %v190 = vld [vmem:[%s165 + $0x44] sm:$0xf]
      %v191 = vld [vmem:[%s165 + $0x48] sm:$0xf]
      %v192 = vld [vmem:[%s165 + $0x4c] sm:$0xf]
      %v193 = vld [vmem:[%s165 + $0x50] sm:$0xf]
      %v194 = vld [vmem:[%s165 + $0x54] sm:$0xf]
      %v195 = vld [vmem:[%s165 + $0x58] sm:$0xf]
      %v196 = vld [vmem:[%s165 + $0x5c] sm:$0xf]
      %v197 = vld [vmem:[%s165 + $0x60] sm:$0xf]
      %v198 = vld [vmem:[%s165 + $0x64] sm:$0xf]
      %v199 = vld [vmem:[%s165 + $0x68] sm:$0xf]
      %v200 = vld [vmem:[%s165 + $0x6c] sm:$0xf]
      %v201 = vld [vmem:[%s165 + $0x70] sm:$0xf]
      %v202 = vld [vmem:[%s165 + $0x74] sm:$0xf]
      %v203 = vld [vmem:[%s165 + $0x78] sm:$0xf]
      %v204 = vld [vmem:[%s165 + $0x7c] sm:$0xf]
      %v205 = vld [vmem:[%s165 + $0x80] sm:$0xf]
      %v206 = vld [vmem:[%s165 + $0x84] sm:$0xf]
      %v207 = vld [vmem:[%s165 + $0x88] sm:$0xf]
      %v208 = vld [vmem:[%s165 + $0x8c] sm:$0xf]
      %v209 = vld [vmem:[%s165 + $0x90] sm:$0xf]
      %v210 = vld [vmem:[%s165 + $0x94] sm:$0xf]
      %v211 = vld [vmem:[%s165 + $0x98] sm:$0xf]
      %v212 = vld [vmem:[%s165 + $0x9c] sm:$0xf]
      %v213 = vld [vmem:[%s165 + $0xa0] sm:$0xf]
      %v214 = vld [vmem:[%s165 + $0xa4] sm:$0xf]
      %v215 = vld [vmem:[%s165 + $0xa8] sm:$0xf]
      %v216 = vld [vmem:[%s165 + $0xac] sm:$0xf]
      %v217 = vld [vmem:[%s165 + $0xb0] sm:$0xf]
      %v218 = vld [vmem:[%s165 + $0xb4] sm:$0xf]
      %v219 = vld [vmem:[%s165 + $0xb8] sm:$0xf]
      %v220 = vld [vmem:[%s165 + $0xbc] sm:$0xf]
      %v221 = vld [vmem:[%s165 + $0xc0] sm:$0xf]
      %v222 = vld [vmem:[%s165 + $0xc4] sm:$0xf]
      %v223 = vld [vmem:[%s165 + $0xc8] sm:$0xf]
      %v224 = vld [vmem:[%s165 + $0xcc] sm:$0xf]
      %v225 = vld [vmem:[%s165 + $0xd0] sm:$0xf]
      %v226 = vld [vmem:[%s165 + $0xd4] sm:$0xf]
      %v227 = vld [vmem:[%s165 + $0xd8] sm:$0xf]
      %v228 = vld [vmem:[%s165 + $0xdc] sm:$0xf]
      %v229 = vld [vmem:[%s165 + $0xe0] sm:$0xf]
      %v230 = vld [vmem:[%s165 + $0xe4] sm:$0xf]
      %v231 = vld [vmem:[%s165 + $0xe8] sm:$0xf]
      %v232 = vld [vmem:[%s165 + $0xec] sm:$0xf]
      %v233 = vld [vmem:[%s165 + $0xf0] sm:$0xf]
      %v234 = vld [vmem:[%s165 + $0xf4] sm:$0xf]
      %v235 = vld [vmem:[%s165 + $0xf8] sm:$0xf]
      %v236 = vld [vmem:[%s165 + $0xfc] sm:$0xf]
      %v237 = vld [vmem:[%s165 + $0x100] sm:$0xf]
      %v238 = vld [vmem:[%s165 + $0x104] sm:$0xf]
      %v239 = vld [vmem:[%s165 + $0x108] sm:$0xf]
      %v240 = vld [vmem:[%s165 + $0x10c] sm:$0xf]
      %v241 = vld [vmem:[%s165 + $0x110] sm:$0xf]
      %v242 = vld [vmem:[%s165 + $0x114] sm:$0xf]
      %v243 = vld [vmem:[%s165 + $0x118] sm:$0xf]
      %v244 = vld [vmem:[%s165 + $0x11c] sm:$0xf]
      %v245 = vld [vmem:[%s165 + $0x120] sm:$0xf]
      %v246 = vld [vmem:[%s165 + $0x124] sm:$0xf]
      %v247 = vld [vmem:[%s165 + $0x128] sm:$0xf]
      %v248 = vld [vmem:[%s165 + $0x12c] sm:$0xf]
      %v249 = vld [vmem:[%s165 + $0x130] sm:$0xf]
      %v250 = vld [vmem:[%s165 + $0x134] sm:$0xf]
      %v251 = vld [vmem:[%s165 + $0x138] sm:$0xf]
      %v252 = vld [vmem:[%s165 + $0x13c] sm:$0xf]
      %v253 = vld [vmem:[%s165 + $0x140] sm:$0xf]
      %v254 = vld [vmem:[%s165 + $0x144] sm:$0xf]
      %v255 = vld [vmem:[%s165 + $0x148] sm:$0xf]
      %v256 = vld [vmem:[%s165 + $0x14c] sm:$0xf]
      %v257 = vld [vmem:[%s165 + $0x150] sm:$0xf]
      %v258 = vld [vmem:[%s165 + $0x154] sm:$0xf]
      %v259 = vld [vmem:[%s165 + $0x158] sm:$0xf]
      %v260 = vld [vmem:[%s165 + $0x15c] sm:$0xf]
      %v261 = vld [vmem:[%s165 + $0x160] sm:$0xf]
      %v262 = vld [vmem:[%s165 + $0x164] sm:$0xf]
      %v263 = vld [vmem:[%s165 + $0x168] sm:$0xf]
      %v264 = vld [vmem:[%s165 + $0x16c] sm:$0xf]
      %v265 = vld [vmem:[%s165 + $0x170] sm:$0xf]
      %v266 = vld [vmem:[%s165 + $0x174] sm:$0xf]
      %v267 = vld [vmem:[%s165 + $0x178] sm:$0xf]
      %v268 = vld [vmem:[%s165 + $0x17c] sm:$0xf]
      %v269 = vld [vmem:[%s165 + $0x180] sm:$0xf]
      %v270 = vld [vmem:[%s165 + $0x184] sm:$0xf]
      %v271 = vld [vmem:[%s165 + $0x188] sm:$0xf]
      %v272 = vld [vmem:[%s165 + $0x18c] sm:$0xf]
      %v273 = vld [vmem:[%s165 + $0x190] sm:$0xf]
      %v274 = vld [vmem:[%s165 + $0x194] sm:$0xf]
      %v275 = vld [vmem:[%s165 + $0x198] sm:$0xf]
      %v276 = vld [vmem:[%s165 + $0x19c] sm:$0xf]
      %v277 = vld [vmem:[%s165 + $0x1a0] sm:$0xf]
      %v278 = vld [vmem:[%s165 + $0x1a4] sm:$0xf]
      %v279 = vld [vmem:[%s165 + $0x1a8] sm:$0xf]
      %v280 = vld [vmem:[%s165 + $0x1ac] sm:$0xf]
      %v281 = vld [vmem:[%s165 + $0x1b0] sm:$0xf]
      %v282 = vld [vmem:[%s165 + $0x1b4] sm:$0xf]
      %v283 = vld [vmem:[%s165 + $0x1b8] sm:$0xf]
      %v284 = vld [vmem:[%s165 + $0x1bc] sm:$0xf]
      %v285 = vld [vmem:[%s165 + $0x1c0] sm:$0xf]
      %v286 = vld [vmem:[%s165 + $0x1c4] sm:$0xf]
      %v287 = vld [vmem:[%s165 + $0x1c8] sm:$0xf]
      %v288 = vld [vmem:[%s165 + $0x1cc] sm:$0xf]
      %v289 = vld [vmem:[%s165 + $0x1d0] sm:$0xf]
      %v290 = vld [vmem:[%s165 + $0x1d4] sm:$0xf]
      %v291 = vld [vmem:[%s165 + $0x1d8] sm:$0xf]
      %v292 = vld [vmem:[%s165 + $0x1dc] sm:$0xf]
      %v293 = vld [vmem:[%s165 + $0x1e0] sm:$0xf]
      %v294 = vld [vmem:[%s165 + $0x1e4] sm:$0xf]
      %v295 = vld [vmem:[%s165 + $0x1e8] sm:$0xf]
      %v296 = vld [vmem:[%s165 + $0x1ec] sm:$0xf]
      %v297 = vld [vmem:[%s165 + $0x1f0] sm:$0xf]
      %v298 = vld [vmem:[%s165 + $0x1f4] sm:$0xf]
      %v299 = vld [vmem:[%s165 + $0x1f8] sm:$0xf]
      %v300 = vld [vmem:[%s165 + $0x1fc] sm:$0xf]
      %v301 = vld [vmem:[%s1] sm:$0xf]
      %v302 = vld [vmem:[%s1 + $0x4] sm:$0xf]
      %v303 = vld [vmem:[%s1 + $0x8] sm:$0xf]
      %v304 = vld [vmem:[%s1 + $0xc] sm:$0x3]
      %v433 = vunpack.c.l.b16 %v173
      %v434 = vunpack.c.l.b16 %v174
      %v435 = vunpack.c.l.b16 %v175
      %v436 = vunpack.c.l.b16 %v176
      %v437 = vunpack.c.l.b16 %v177
      %v438 = vunpack.c.l.b16 %v178
      %v439 = vunpack.c.l.b16 %v179
      %v440 = vunpack.c.l.b16 %v180
      %v441 = vunpack.c.l.b16 %v181
      %v442 = vunpack.c.l.b16 %v182
      %v443 = vunpack.c.l.b16 %v183
      %v444 = vunpack.c.l.b16 %v184
      %v445 = vunpack.c.l.b16 %v185
      %v446 = vunpack.c.l.b16 %v186
      %v447 = vunpack.c.l.b16 %v187
      %v448 = vunpack.c.l.b16 %v188
      %v449 = vunpack.c.l.b16 %v189
      %v450 = vunpack.c.l.b16 %v190
      %v451 = vunpack.c.l.b16 %v191
      %v452 = vunpack.c.l.b16 %v192
      %v453 = vunpack.c.l.b16 %v193
      %v454 = vunpack.c.l.b16 %v194
      %v455 = vunpack.c.l.b16 %v195
      %v456 = vunpack.c.l.b16 %v196
      %v457 = vunpack.c.l.b16 %v197
      %v458 = vunpack.c.l.b16 %v198
      %v459 = vunpack.c.l.b16 %v199
      %v460 = vunpack.c.l.b16 %v200
      %v461 = vunpack.c.l.b16 %v201
      %v462 = vunpack.c.l.b16 %v202
      %v463 = vunpack.c.l.b16 %v203
      %v464 = vunpack.c.l.b16 %v204
      %v465 = vunpack.c.l.b16 %v205
      %v466 = vunpack.c.l.b16 %v206
      %v467 = vunpack.c.l.b16 %v207
      %v468 = vunpack.c.l.b16 %v208
      %v469 = vunpack.c.l.b16 %v209
      %v470 = vunpack.c.l.b16 %v210
      %v471 = vunpack.c.l.b16 %v211
      %v472 = vunpack.c.l.b16 %v212
      %v473 = vunpack.c.l.b16 %v213
      %v474 = vunpack.c.l.b16 %v214
      %v475 = vunpack.c.l.b16 %v215
      %v476 = vunpack.c.l.b16 %v216
      %v477 = vunpack.c.l.b16 %v217
      %v478 = vunpack.c.l.b16 %v218
      %v479 = vunpack.c.l.b16 %v219
      %v480 = vunpack.c.l.b16 %v220
      %v481 = vunpack.c.l.b16 %v221
      %v482 = vunpack.c.l.b16 %v222
      %v483 = vunpack.c.l.b16 %v223
      %v484 = vunpack.c.l.b16 %v224
      %v485 = vunpack.c.l.b16 %v225
      %v486 = vunpack.c.l.b16 %v226
      %v487 = vunpack.c.l.b16 %v227
      %v488 = vunpack.c.l.b16 %v228
      %v489 = vunpack.c.l.b16 %v229
      %v490 = vunpack.c.l.b16 %v230
      %v491 = vunpack.c.l.b16 %v231
      %v492 = vunpack.c.l.b16 %v232
      %v493 = vunpack.c.l.b16 %v233
      %v494 = vunpack.c.l.b16 %v234
      %v495 = vunpack.c.l.b16 %v235
      %v496 = vunpack.c.l.b16 %v236
      %v497 = vunpack.c.l.b16 %v237
      %v498 = vunpack.c.l.b16 %v238
      %v499 = vunpack.c.l.b16 %v239
      %v500 = vunpack.c.l.b16 %v240
      %v501 = vunpack.c.l.b16 %v241
      %v502 = vunpack.c.l.b16 %v242
      %v503 = vunpack.c.l.b16 %v243
      %v504 = vunpack.c.l.b16 %v244
      %v505 = vunpack.c.l.b16 %v245
      %v506 = vunpack.c.l.b16 %v246
      %v507 = vunpack.c.l.b16 %v247
      %v508 = vunpack.c.l.b16 %v248
      %v509 = vunpack.c.l.b16 %v249
      %v510 = vunpack.c.l.b16 %v250
      %v511 = vunpack.c.l.b16 %v251
      %v512 = vunpack.c.l.b16 %v252
      %v513 = vunpack.c.l.b16 %v253
      %v514 = vunpack.c.l.b16 %v254
      %v515 = vunpack.c.l.b16 %v255
      %v516 = vunpack.c.l.b16 %v256
      %v517 = vunpack.c.l.b16 %v257
      %v518 = vunpack.c.l.b16 %v258
      %v519 = vunpack.c.l.b16 %v259
      %v520 = vunpack.c.l.b16 %v260
      %v521 = vunpack.c.l.b16 %v261
      %v522 = vunpack.c.l.b16 %v262
      %v523 = vunpack.c.l.b16 %v263
      %v524 = vunpack.c.l.b16 %v264
      %v525 = vunpack.c.l.b16 %v265
      %v526 = vunpack.c.l.b16 %v266
      %v527 = vunpack.c.l.b16 %v267
      %v528 = vunpack.c.l.b16 %v268
      %v529 = vunpack.c.l.b16 %v269
      %v530 = vunpack.c.l.b16 %v270
      %v531 = vunpack.c.l.b16 %v271
      %v532 = vunpack.c.l.b16 %v272
      %v533 = vunpack.c.l.b16 %v273
      %v534 = vunpack.c.l.b16 %v274
      %v535 = vunpack.c.l.b16 %v275
      %v536 = vunpack.c.l.b16 %v276
      %v537 = vunpack.c.l.b16 %v277
      %v538 = vunpack.c.l.b16 %v278
      %v539 = vunpack.c.l.b16 %v279
      %v540 = vunpack.c.l.b16 %v280
      %v541 = vunpack.c.l.b16 %v281
      %v542 = vunpack.c.l.b16 %v282
      %v543 = vunpack.c.l.b16 %v283
      %v544 = vunpack.c.l.b16 %v284
      %v545 = vunpack.c.l.b16 %v285
      %v546 = vunpack.c.l.b16 %v286
      %v547 = vunpack.c.l.b16 %v287
      %v548 = vunpack.c.l.b16 %v288
      %v549 = vunpack.c.l.b16 %v289
      %v550 = vunpack.c.l.b16 %v290
      %v551 = vunpack.c.l.b16 %v291
      %v552 = vunpack.c.l.b16 %v292
      %v553 = vunpack.c.l.b16 %v293
      %v554 = vunpack.c.l.b16 %v294
      %v555 = vunpack.c.l.b16 %v295
      %v556 = vunpack.c.l.b16 %v296
      %v557 = vunpack.c.l.b16 %v297
      %v558 = vunpack.c.l.b16 %v298
      %v559 = vunpack.c.l.b16 %v299
      %v560 = vunpack.c.l.b16 %v300
      %v561 = vpack.c.b16 %v434, %v433
      %v562 = vpack.c.b16 %v436, %v435
      %v563 = vpack.c.b16 %v438, %v437
      %v564 = vpack.c.b16 %v440, %v439
      %v565 = vpack.c.b16 %v442, %v441
      %v566 = vpack.c.b16 %v444, %v443
      %v567 = vpack.c.b16 %v446, %v445
      %v568 = vpack.c.b16 %v448, %v447
      %v569 = vpack.c.b16 %v450, %v449
      %v570 = vpack.c.b16 %v452, %v451
      %v571 = vpack.c.b16 %v454, %v453
      %v572 = vpack.c.b16 %v456, %v455
      %v573 = vpack.c.b16 %v458, %v457
      %v574 = vpack.c.b16 %v460, %v459
      %v575 = vpack.c.b16 %v462, %v461
      %v576 = vpack.c.b16 %v464, %v463
      %v577 = vpack.c.b16 %v466, %v465
      %v578 = vpack.c.b16 %v468, %v467
      %v579 = vpack.c.b16 %v470, %v469
      %v580 = vpack.c.b16 %v472, %v471
      %v581 = vpack.c.b16 %v474, %v473
      %v582 = vpack.c.b16 %v476, %v475
      %v583 = vpack.c.b16 %v478, %v477
      %v584 = vpack.c.b16 %v480, %v479
      %v585 = vpack.c.b16 %v482, %v481
      %v586 = vpack.c.b16 %v484, %v483
      %v587 = vpack.c.b16 %v486, %v485
      %v588 = vpack.c.b16 %v488, %v487
      %v589 = vpack.c.b16 %v490, %v489
      %v590 = vpack.c.b16 %v492, %v491
      %v591 = vpack.c.b16 %v494, %v493
      %v592 = vpack.c.b16 %v496, %v495
      %v593 = vpack.c.b16 %v498, %v497
      %v594 = vpack.c.b16 %v500, %v499
      %v595 = vpack.c.b16 %v502, %v501
      %v596 = vpack.c.b16 %v504, %v503
      %v597 = vpack.c.b16 %v506, %v505
      %v598 = vpack.c.b16 %v508, %v507
      %v599 = vpack.c.b16 %v510, %v509
      %v600 = vpack.c.b16 %v512, %v511
      %v601 = vpack.c.b16 %v514, %v513
      %v602 = vpack.c.b16 %v516, %v515
      %v603 = vpack.c.b16 %v518, %v517
      %v604 = vpack.c.b16 %v520, %v519
      %v605 = vpack.c.b16 %v522, %v521
      %v606 = vpack.c.b16 %v524, %v523
      %v607 = vpack.c.b16 %v526, %v525
      %v608 = vpack.c.b16 %v528, %v527
      %v609 = vpack.c.b16 %v530, %v529
      %v610 = vpack.c.b16 %v532, %v531
      %v611 = vpack.c.b16 %v534, %v533
      %v612 = vpack.c.b16 %v536, %v535
      %v613 = vpack.c.b16 %v538, %v537
      %v614 = vpack.c.b16 %v540, %v539
      %v615 = vpack.c.b16 %v542, %v541
      %v616 = vpack.c.b16 %v544, %v543
      %v617 = vpack.c.b16 %v546, %v545
      %v618 = vpack.c.b16 %v548, %v547
      %v619 = vpack.c.b16 %v550, %v549
      %v620 = vpack.c.b16 %v552, %v551
      %v621 = vpack.c.b16 %v554, %v553
      %v622 = vpack.c.b16 %v556, %v555
      %v623 = vpack.c.b16 %v558, %v557
      %v624 = vpack.c.b16 %v560, %v559
      %v629 = vunpack.c.l.b16 %v301
      %v630 = vunpack.c.l.b16 %v302
      %v631 = vunpack.c.l.b16 %v303
      %v632 = vunpack.c.l.b16 %v304
      %v633 = vpack.c.b16 %v630, %v629
      %v634 = vpack.c.b16 %v632, %v631
      %vm636 = vcmask 220160
      %v638 = vsel %vm636, %v561, 0
      %v641 = vsel %vm636, %v562, 0
      %v644 = vsel %vm636, %v563, 0
      %v647 = vsel %vm636, %v564, 0
      %v650 = vsel %vm636, %v565, 0
      %v653 = vsel %vm636, %v566, 0
      %v656 = vsel %vm636, %v567, 0
      %v659 = vsel %vm636, %v568, 0
      %v662 = vsel %vm636, %v569, 0
      %v665 = vsel %vm636, %v570, 0
      %v668 = vsel %vm636, %v571, 0
      %v671 = vsel %vm636, %v572, 0
      %v674 = vsel %vm636, %v573, 0
      %v677 = vsel %vm636, %v574, 0
      %v680 = vsel %vm636, %v575, 0
      %v683 = vsel %vm636, %v576, 0
      %v686 = vsel %vm636, %v577, 0
      %v689 = vsel %vm636, %v578, 0
      %v692 = vsel %vm636, %v579, 0
      %v695 = vsel %vm636, %v580, 0
      %v698 = vsel %vm636, %v581, 0
      %v701 = vsel %vm636, %v582, 0
      %v704 = vsel %vm636, %v583, 0
      %v707 = vsel %vm636, %v584, 0
      %v710 = vsel %vm636, %v585, 0
      %v713 = vsel %vm636, %v586, 0
      %v716 = vsel %vm636, %v587, 0
      %v719 = vsel %vm636, %v588, 0
      %v722 = vsel %vm636, %v589, 0
      %v725 = vsel %vm636, %v590, 0
      %v728 = vsel %vm636, %v591, 0
      %v731 = vsel %vm636, %v592, 0
      %v734 = vsel %vm636, %v593, 0
      %v737 = vsel %vm636, %v594, 0
      %v740 = vsel %vm636, %v595, 0
      %v743 = vsel %vm636, %v596, 0
      %v746 = vsel %vm636, %v597, 0
      %v749 = vsel %vm636, %v598, 0
      %v752 = vsel %vm636, %v599, 0
      %v755 = vsel %vm636, %v600, 0
      %v758 = vsel %vm636, %v601, 0
      %v761 = vsel %vm636, %v602, 0
      %v764 = vsel %vm636, %v603, 0
      %v767 = vsel %vm636, %v604, 0
      %v770 = vsel %vm636, %v605, 0
      %v773 = vsel %vm636, %v606, 0
      %v776 = vsel %vm636, %v607, 0
      %v779 = vsel %vm636, %v608, 0
      %v782 = vsel %vm636, %v609, 0
      %v785 = vsel %vm636, %v610, 0
      %v788 = vsel %vm636, %v611, 0
      %v791 = vsel %vm636, %v612, 0
      %v794 = vsel %vm636, %v613, 0
      %v797 = vsel %vm636, %v614, 0
      %v800 = vsel %vm636, %v615, 0
      %v803 = vsel %vm636, %v616, 0
      %v806 = vsel %vm636, %v617, 0
      %v809 = vsel %vm636, %v618, 0
      %v812 = vsel %vm636, %v619, 0
      %v815 = vsel %vm636, %v620, 0
      %v818 = vsel %vm636, %v621, 0
      %v821 = vsel %vm636, %v622, 0
      %v824 = vsel %vm636, %v623, 0
      %v827 = vsel %vm636, %v624, 0
      %vm829 = vcmask 1044480
      %vm830 = vcmask 1045504
      %v831 = vsel %vm829, 4294967295, 65535
      %v832 = vsel %vm830, %v831, 0
      %v834 = vand.u32 %v634, %v832
      %836 = vmatprep.subr.bf16.mxu0 0
      %837 = vmatpush1.bf16.msra.mxu0 0
      %838 = vmatprep.subr.bf16.mxu0 0
      %839 = vmatpush1.bf16.msra.mxu0 0
      %840 = vmatprep.subr.bf16.mxu0 0
      %841 = vmatpush1.bf16.msra.mxu0 0
      %842 = vmatprep.subr.bf16.mxu0 0
      %843 = vmatpush1.bf16.msra.mxu0 0
      %844 = vmatprep.subr.bf16.mxu0 0
      %845 = vmatpush1.bf16.msra.mxu0 0
      %846 = vmatprep.subr.bf16.mxu0 0
      %847 = vmatpush1.bf16.msra.mxu0 0
      %848 = vmatprep.subr.bf16.mxu0 0
      %849 = vmatpush1.bf16.msra.mxu0 %v834
      %850 = vmatprep.subr.bf16.mxu0 0
      %851 = vmatpush1.bf16.msra.mxu0 %v633
      %852 = vmatprep.subr.bf16.mxu0 0
      %853 = vmatpush2.bf16.msra.mxu0 0
      %854 = vmatprep.subr.bf16.mxu0 0
      %855 = vmatpush2.bf16.msra.mxu0 0
      %856 = vmatprep.subr.bf16.mxu0 0
      %857 = vmatpush2.bf16.msra.mxu0 0
      %858 = vmatprep.subr.bf16.mxu0 0
      %859 = vmatpush2.bf16.msra.mxu0 0
      %860 = vmatprep.subr.bf16.mxu0 0
      %861 = vmatpush2.bf16.msra.mxu0 0
      %862 = vmatprep.subr.bf16.mxu0 0
      %863 = vmatpush2.bf16.msra.mxu0 0
      %864 = vmatprep.subr.bf16.mxu0 0
      %865 = vmatpush2.bf16.msra.mxu0 0
      %866 = vmatprep.subr.bf16.mxu0 0
      %867 = vmatpush2.bf16.msra.mxu0 0
      %868 = vmatprep.mubr.bf16.mxu0 0
      %869 = vmatmul.mubr.bf16.gmra.mxu0 %v638
      %v870 = vpop.f32.mrf.mxu0
      %v871 = vadd.f32 0.0, %v870
      %v872 = vpop.f32.mrf.mxu0
      %v873 = vpop.f32.mrf.mxu0
      %v874 = vadd.f32 0.0, %v873
      %v875 = vpop.f32.mrf.mxu0
      %876 = vmatprep.mubr.bf16.mxu0 0
      %877 = vmatmul.mubr.bf16.gmra.mxu0 %v641
      %v878 = vpop.f32.mrf.mxu0
      %v879 = vadd.f32 0.0, %v878
      %v880 = vpop.f32.mrf.mxu0
      %v881 = vpop.f32.mrf.mxu0
      %v882 = vadd.f32 0.0, %v881
      %v883 = vpop.f32.mrf.mxu0
      %884 = vmatprep.mubr.bf16.mxu0 0
      %885 = vmatmul.mubr.bf16.gmra.mxu0 %v644
      %v886 = vpop.f32.mrf.mxu0
      %v887 = vadd.f32 0.0, %v886
      %v888 = vpop.f32.mrf.mxu0
      %v889 = vpop.f32.mrf.mxu0
      %v890 = vadd.f32 0.0, %v889
      %v891 = vpop.f32.mrf.mxu0
      %892 = vmatprep.mubr.bf16.mxu0 0
      %893 = vmatmul.mubr.bf16.gmra.mxu0 %v647
      %v894 = vpop.f32.mrf.mxu0
      %v895 = vadd.f32 0.0, %v894
      %v896 = vpop.f32.mrf.mxu0
      %v897 = vpop.f32.mrf.mxu0
      %v898 = vadd.f32 0.0, %v897
      %v899 = vpop.f32.mrf.mxu0
      %900 = vmatprep.mubr.bf16.mxu0 0
      %901 = vmatmul.mubr.bf16.gmra.mxu0 %v650
      %v902 = vpop.f32.mrf.mxu0
      %v903 = vadd.f32 0.0, %v902
      %v904 = vpop.f32.mrf.mxu0
      %v905 = vpop.f32.mrf.mxu0
      %v906 = vadd.f32 0.0, %v905
      %v907 = vpop.f32.mrf.mxu0
      %908 = vmatprep.mubr.bf16.mxu0 0
      %909 = vmatmul.mubr.bf16.gmra.mxu0 %v653
      %v910 = vpop.f32.mrf.mxu0
      %v911 = vadd.f32 0.0, %v910
      %v912 = vpop.f32.mrf.mxu0
      %v913 = vpop.f32.mrf.mxu0
      %v914 = vadd.f32 0.0, %v913
      %v915 = vpop.f32.mrf.mxu0
      %916 = vmatprep.mubr.bf16.mxu0 0
      %917 = vmatmul.mubr.bf16.gmra.mxu0 %v656
      %v918 = vpop.f32.mrf.mxu0
      %v919 = vadd.f32 0.0, %v918
      %v920 = vpop.f32.mrf.mxu0
      %v921 = vpop.f32.mrf.mxu0
      %v922 = vadd.f32 0.0, %v921
      %v923 = vpop.f32.mrf.mxu0
      %924 = vmatprep.mubr.bf16.mxu0 0
      %925 = vmatmul.mubr.bf16.gmra.mxu0 %v659
      %v926 = vpop.f32.mrf.mxu0
      %v927 = vadd.f32 0.0, %v926
      %v928 = vpop.f32.mrf.mxu0
      %v929 = vpop.f32.mrf.mxu0
      %v930 = vadd.f32 0.0, %v929
      %v931 = vpop.f32.mrf.mxu0
      %932 = vmatprep.mubr.bf16.mxu0 0
      %933 = vmatmul.mubr.bf16.gmra.mxu0 %v662
      %v934 = vpop.f32.mrf.mxu0
      %v935 = vadd.f32 0.0, %v934
      %v936 = vpop.f32.mrf.mxu0
      %v937 = vpop.f32.mrf.mxu0
      %v938 = vadd.f32 0.0, %v937
      %v939 = vpop.f32.mrf.mxu0
      %940 = vmatprep.mubr.bf16.mxu0 0
      %941 = vmatmul.mubr.bf16.gmra.mxu0 %v665
      %v942 = vpop.f32.mrf.mxu0
      %v943 = vadd.f32 0.0, %v942
      %v944 = vpop.f32.mrf.mxu0
      %v945 = vpop.f32.mrf.mxu0
      %v946 = vadd.f32 0.0, %v945
      %v947 = vpop.f32.mrf.mxu0
      %948 = vmatprep.mubr.bf16.mxu0 0
      %949 = vmatmul.mubr.bf16.gmra.mxu0 %v668
      %v950 = vpop.f32.mrf.mxu0
      %v951 = vadd.f32 0.0, %v950
      %v952 = vpop.f32.mrf.mxu0
      %v953 = vpop.f32.mrf.mxu0
      %v954 = vadd.f32 0.0, %v953
      %v955 = vpop.f32.mrf.mxu0
      %956 = vmatprep.mubr.bf16.mxu0 0
      %957 = vmatmul.mubr.bf16.gmra.mxu0 %v671
      %v958 = vpop.f32.mrf.mxu0
      %v959 = vadd.f32 0.0, %v958
      %v960 = vpop.f32.mrf.mxu0
      %v961 = vpop.f32.mrf.mxu0
      %v962 = vadd.f32 0.0, %v961
      %v963 = vpop.f32.mrf.mxu0
      %964 = vmatprep.mubr.bf16.mxu0 0
      %965 = vmatmul.mubr.bf16.gmra.mxu0 %v674
      %v966 = vpop.f32.mrf.mxu0
      %v967 = vadd.f32 0.0, %v966
      %v968 = vpop.f32.mrf.mxu0
      %v969 = vpop.f32.mrf.mxu0
      %v970 = vadd.f32 0.0, %v969
      %v971 = vpop.f32.mrf.mxu0
      %972 = vmatprep.mubr.bf16.mxu0 0
      %973 = vmatmul.mubr.bf16.gmra.mxu0 %v677
      %v974 = vpop.f32.mrf.mxu0
      %v975 = vadd.f32 0.0, %v974
      %v976 = vpop.f32.mrf.mxu0
      %v977 = vpop.f32.mrf.mxu0
      %v978 = vadd.f32 0.0, %v977
      %v979 = vpop.f32.mrf.mxu0
      %980 = vmatprep.mubr.bf16.mxu0 0
      %981 = vmatmul.mubr.bf16.gmra.mxu0 %v680
      %v982 = vpop.f32.mrf.mxu0
      %v983 = vadd.f32 0.0, %v982
      %v984 = vpop.f32.mrf.mxu0
      %v985 = vpop.f32.mrf.mxu0
      %v986 = vadd.f32 0.0, %v985
      %v987 = vpop.f32.mrf.mxu0
      %988 = vmatprep.mubr.bf16.mxu0 0
      %989 = vmatmul.mubr.bf16.gmra.mxu0 %v683
      %v990 = vpop.f32.mrf.mxu0
      %v991 = vadd.f32 0.0, %v990
      %v992 = vpop.f32.mrf.mxu0
      %v993 = vpop.f32.mrf.mxu0
      %v994 = vadd.f32 0.0, %v993
      %v995 = vpop.f32.mrf.mxu0
      %996 = vmatprep.mubr.bf16.mxu0 0
      %997 = vmatmul.mubr.bf16.gmra.mxu0 %v686
      %v998 = vpop.f32.mrf.mxu0
      %v999 = vadd.f32 0.0, %v998
      %v1000 = vpop.f32.mrf.mxu0
      %v1001 = vpop.f32.mrf.mxu0
      %v1002 = vadd.f32 0.0, %v1001
      %v1003 = vpop.f32.mrf.mxu0
      %1004 = vmatprep.mubr.bf16.mxu0 0
      %1005 = vmatmul.mubr.bf16.gmra.mxu0 %v689
      %v1006 = vpop.f32.mrf.mxu0
      %v1007 = vadd.f32 0.0, %v1006
      %v1008 = vpop.f32.mrf.mxu0
      %v1009 = vpop.f32.mrf.mxu0
      %v1010 = vadd.f32 0.0, %v1009
      %v1011 = vpop.f32.mrf.mxu0
      %1012 = vmatprep.mubr.bf16.mxu0 0
      %1013 = vmatmul.mubr.bf16.gmra.mxu0 %v692
      %v1014 = vpop.f32.mrf.mxu0
      %v1015 = vadd.f32 0.0, %v1014
      %v1016 = vpop.f32.mrf.mxu0
      %v1017 = vpop.f32.mrf.mxu0
      %v1018 = vadd.f32 0.0, %v1017
      %v1019 = vpop.f32.mrf.mxu0
      %1020 = vmatprep.mubr.bf16.mxu0 0
      %1021 = vmatmul.mubr.bf16.gmra.mxu0 %v695
      %v1022 = vpop.f32.mrf.mxu0
      %v1023 = vadd.f32 0.0, %v1022
      %v1024 = vpop.f32.mrf.mxu0
      %v1025 = vpop.f32.mrf.mxu0
      %v1026 = vadd.f32 0.0, %v1025
      %v1027 = vpop.f32.mrf.mxu0
      %1028 = vmatprep.mubr.bf16.mxu0 0
      %1029 = vmatmul.mubr.bf16.gmra.mxu0 %v698
      %v1030 = vpop.f32.mrf.mxu0
      %v1031 = vadd.f32 0.0, %v1030
      %v1032 = vpop.f32.mrf.mxu0
      %v1033 = vpop.f32.mrf.mxu0
      %v1034 = vadd.f32 0.0, %v1033
      %v1035 = vpop.f32.mrf.mxu0
      %1036 = vmatprep.mubr.bf16.mxu0 0
      %1037 = vmatmul.mubr.bf16.gmra.mxu0 %v701
      %v1038 = vpop.f32.mrf.mxu0
      %v1039 = vadd.f32 0.0, %v1038
      %v1040 = vpop.f32.mrf.mxu0
      %v1041 = vpop.f32.mrf.mxu0
      %v1042 = vadd.f32 0.0, %v1041
      %v1043 = vpop.f32.mrf.mxu0
      %1044 = vmatprep.mubr.bf16.mxu0 0
      %1045 = vmatmul.mubr.bf16.gmra.mxu0 %v704
      %v1046 = vpop.f32.mrf.mxu0
      %v1047 = vadd.f32 0.0, %v1046
      %v1048 = vpop.f32.mrf.mxu0
      %v1049 = vpop.f32.mrf.mxu0
      %v1050 = vadd.f32 0.0, %v1049
      %v1051 = vpop.f32.mrf.mxu0
      %1052 = vmatprep.mubr.bf16.mxu0 0
      %1053 = vmatmul.mubr.bf16.gmra.mxu0 %v707
      %v1054 = vpop.f32.mrf.mxu0
      %v1055 = vadd.f32 0.0, %v1054
      %v1056 = vpop.f32.mrf.mxu0
      %v1057 = vpop.f32.mrf.mxu0
      %v1058 = vadd.f32 0.0, %v1057
      %v1059 = vpop.f32.mrf.mxu0
      %1060 = vmatprep.mubr.bf16.mxu0 0
      %1061 = vmatmul.mubr.bf16.gmra.mxu0 %v710
      %v1062 = vpop.f32.mrf.mxu0
      %v1063 = vadd.f32 0.0, %v1062
      %v1064 = vpop.f32.mrf.mxu0
      %v1065 = vpop.f32.mrf.mxu0
      %v1066 = vadd.f32 0.0, %v1065
      %v1067 = vpop.f32.mrf.mxu0
      %1068 = vmatprep.mubr.bf16.mxu0 0
      %1069 = vmatmul.mubr.bf16.gmra.mxu0 %v713
      %v1070 = vpop.f32.mrf.mxu0
      %v1071 = vadd.f32 0.0, %v1070
      %v1072 = vpop.f32.mrf.mxu0
      %v1073 = vpop.f32.mrf.mxu0
      %v1074 = vadd.f32 0.0, %v1073
      %v1075 = vpop.f32.mrf.mxu0
      %1076 = vmatprep.mubr.bf16.mxu0 0
      %1077 = vmatmul.mubr.bf16.gmra.mxu0 %v716
      %v1078 = vpop.f32.mrf.mxu0
      %v1079 = vadd.f32 0.0, %v1078
      %v1080 = vpop.f32.mrf.mxu0
      %v1081 = vpop.f32.mrf.mxu0
      %v1082 = vadd.f32 0.0, %v1081
      %v1083 = vpop.f32.mrf.mxu0
      %1084 = vmatprep.mubr.bf16.mxu0 0
      %1085 = vmatmul.mubr.bf16.gmra.mxu0 %v719
      %v1086 = vpop.f32.mrf.mxu0
      %v1087 = vadd.f32 0.0, %v1086
      %v1088 = vpop.f32.mrf.mxu0
      %v1089 = vpop.f32.mrf.mxu0
      %v1090 = vadd.f32 0.0, %v1089
      %v1091 = vpop.f32.mrf.mxu0
      %1092 = vmatprep.mubr.bf16.mxu0 0
      %1093 = vmatmul.mubr.bf16.gmra.mxu0 %v722
      %v1094 = vpop.f32.mrf.mxu0
      %v1095 = vadd.f32 0.0, %v1094
      %v1096 = vpop.f32.mrf.mxu0
      %v1097 = vpop.f32.mrf.mxu0
      %v1098 = vadd.f32 0.0, %v1097
      %v1099 = vpop.f32.mrf.mxu0
      %1100 = vmatprep.mubr.bf16.mxu0 0
      %1101 = vmatmul.mubr.bf16.gmra.mxu0 %v725
      %v1102 = vpop.f32.mrf.mxu0
      %v1103 = vadd.f32 0.0, %v1102
      %v1104 = vpop.f32.mrf.mxu0
      %v1105 = vpop.f32.mrf.mxu0
      %v1106 = vadd.f32 0.0, %v1105
      %v1107 = vpop.f32.mrf.mxu0
      %1108 = vmatprep.mubr.bf16.mxu0 0
      %1109 = vmatmul.mubr.bf16.gmra.mxu0 %v728
      %v1110 = vpop.f32.mrf.mxu0
      %v1111 = vadd.f32 0.0, %v1110
      %v1112 = vpop.f32.mrf.mxu0
      %v1113 = vpop.f32.mrf.mxu0
      %v1114 = vadd.f32 0.0, %v1113
      %v1115 = vpop.f32.mrf.mxu0
      %1116 = vmatprep.mubr.bf16.mxu0 0
      %1117 = vmatmul.mubr.bf16.gmra.mxu0 %v731
      %v1118 = vpop.f32.mrf.mxu0
      %v1119 = vadd.f32 0.0, %v1118
      %v1120 = vpop.f32.mrf.mxu0
      %v1121 = vpop.f32.mrf.mxu0
      %v1122 = vadd.f32 0.0, %v1121
      %v1123 = vpop.f32.mrf.mxu0
      %1124 = vmatprep.mubr.bf16.mxu0 0
      %1125 = vmatmul.mubr.bf16.gmra.mxu0 %v734
      %v1126 = vpop.f32.mrf.mxu0
      %v1127 = vadd.f32 0.0, %v1126
      %v1128 = vpop.f32.mrf.mxu0
      %v1129 = vpop.f32.mrf.mxu0
      %v1130 = vadd.f32 0.0, %v1129
      %v1131 = vpop.f32.mrf.mxu0
      %1132 = vmatprep.mubr.bf16.mxu0 0
      %1133 = vmatmul.mubr.bf16.gmra.mxu0 %v737
      %v1134 = vpop.f32.mrf.mxu0
      %v1135 = vadd.f32 0.0, %v1134
      %v1136 = vpop.f32.mrf.mxu0
      %v1137 = vpop.f32.mrf.mxu0
      %v1138 = vadd.f32 0.0, %v1137
      %v1139 = vpop.f32.mrf.mxu0
      %1140 = vmatprep.mubr.bf16.mxu0 0
      %1141 = vmatmul.mubr.bf16.gmra.mxu0 %v740
      %v1142 = vpop.f32.mrf.mxu0
      %v1143 = vadd.f32 0.0, %v1142
      %v1144 = vpop.f32.mrf.mxu0
      %v1145 = vpop.f32.mrf.mxu0
      %v1146 = vadd.f32 0.0, %v1145
      %v1147 = vpop.f32.mrf.mxu0
      %1148 = vmatprep.mubr.bf16.mxu0 0
      %1149 = vmatmul.mubr.bf16.gmra.mxu0 %v743
      %v1150 = vpop.f32.mrf.mxu0
      %v1151 = vadd.f32 0.0, %v1150
      %v1152 = vpop.f32.mrf.mxu0
      %v1153 = vpop.f32.mrf.mxu0
      %v1154 = vadd.f32 0.0, %v1153
      %v1155 = vpop.f32.mrf.mxu0
      %1156 = vmatprep.mubr.bf16.mxu0 0
      %1157 = vmatmul.mubr.bf16.gmra.mxu0 %v746
      %v1158 = vpop.f32.mrf.mxu0
      %v1159 = vadd.f32 0.0, %v1158
      %v1160 = vpop.f32.mrf.mxu0
      %v1161 = vpop.f32.mrf.mxu0
      %v1162 = vadd.f32 0.0, %v1161
      %v1163 = vpop.f32.mrf.mxu0
      %1164 = vmatprep.mubr.bf16.mxu0 0
      %1165 = vmatmul.mubr.bf16.gmra.mxu0 %v749
      %v1166 = vpop.f32.mrf.mxu0
      %v1167 = vadd.f32 0.0, %v1166
      %v1168 = vpop.f32.mrf.mxu0
      %v1169 = vpop.f32.mrf.mxu0
      %v1170 = vadd.f32 0.0, %v1169
      %v1171 = vpop.f32.mrf.mxu0
      %1172 = vmatprep.mubr.bf16.mxu0 0
      %1173 = vmatmul.mubr.bf16.gmra.mxu0 %v752
      %v1174 = vpop.f32.mrf.mxu0
      %v1175 = vadd.f32 0.0, %v1174
      %v1176 = vpop.f32.mrf.mxu0
      %v1177 = vpop.f32.mrf.mxu0
      %v1178 = vadd.f32 0.0, %v1177
      %v1179 = vpop.f32.mrf.mxu0
      %1180 = vmatprep.mubr.bf16.mxu0 0
      %1181 = vmatmul.mubr.bf16.gmra.mxu0 %v755
      %v1182 = vpop.f32.mrf.mxu0
      %v1183 = vadd.f32 0.0, %v1182
      %v1184 = vpop.f32.mrf.mxu0
      %v1185 = vpop.f32.mrf.mxu0
      %v1186 = vadd.f32 0.0, %v1185
      %v1187 = vpop.f32.mrf.mxu0
      %1188 = vmatprep.mubr.bf16.mxu0 0
      %1189 = vmatmul.mubr.bf16.gmra.mxu0 %v758
      %v1190 = vpop.f32.mrf.mxu0
      %v1191 = vadd.f32 0.0, %v1190
      %v1192 = vpop.f32.mrf.mxu0
      %v1193 = vpop.f32.mrf.mxu0
      %v1194 = vadd.f32 0.0, %v1193
      %v1195 = vpop.f32.mrf.mxu0
      %1196 = vmatprep.mubr.bf16.mxu0 0
      %1197 = vmatmul.mubr.bf16.gmra.mxu0 %v761
      %v1198 = vpop.f32.mrf.mxu0
      %v1199 = vadd.f32 0.0, %v1198
      %v1200 = vpop.f32.mrf.mxu0
      %v1201 = vpop.f32.mrf.mxu0
      %v1202 = vadd.f32 0.0, %v1201
      %v1203 = vpop.f32.mrf.mxu0
      %1204 = vmatprep.mubr.bf16.mxu0 0
      %1205 = vmatmul.mubr.bf16.gmra.mxu0 %v764
      %v1206 = vpop.f32.mrf.mxu0
      %v1207 = vadd.f32 0.0, %v1206
      %v1208 = vpop.f32.mrf.mxu0
      %v1209 = vpop.f32.mrf.mxu0
      %v1210 = vadd.f32 0.0, %v1209
      %v1211 = vpop.f32.mrf.mxu0
      %1212 = vmatprep.mubr.bf16.mxu0 0
      %1213 = vmatmul.mubr.bf16.gmra.mxu0 %v767
      %v1214 = vpop.f32.mrf.mxu0
      %v1215 = vadd.f32 0.0, %v1214
      %v1216 = vpop.f32.mrf.mxu0
      %v1217 = vpop.f32.mrf.mxu0
      %v1218 = vadd.f32 0.0, %v1217
      %v1219 = vpop.f32.mrf.mxu0
      %1220 = vmatprep.mubr.bf16.mxu0 0
      %1221 = vmatmul.mubr.bf16.gmra.mxu0 %v770
      %v1222 = vpop.f32.mrf.mxu0
      %v1223 = vadd.f32 0.0, %v1222
      %v1224 = vpop.f32.mrf.mxu0
      %v1225 = vpop.f32.mrf.mxu0
      %v1226 = vadd.f32 0.0, %v1225
      %v1227 = vpop.f32.mrf.mxu0
      %1228 = vmatprep.mubr.bf16.mxu0 0
      %1229 = vmatmul.mubr.bf16.gmra.mxu0 %v773
      %v1230 = vpop.f32.mrf.mxu0
      %v1231 = vadd.f32 0.0, %v1230
      %v1232 = vpop.f32.mrf.mxu0
      %v1233 = vpop.f32.mrf.mxu0
      %v1234 = vadd.f32 0.0, %v1233
      %v1235 = vpop.f32.mrf.mxu0
      %1236 = vmatprep.mubr.bf16.mxu0 0
      %1237 = vmatmul.mubr.bf16.gmra.mxu0 %v776
      %v1238 = vpop.f32.mrf.mxu0
      %v1239 = vadd.f32 0.0, %v1238
      %v1240 = vpop.f32.mrf.mxu0
      %v1241 = vpop.f32.mrf.mxu0
      %v1242 = vadd.f32 0.0, %v1241
      %v1243 = vpop.f32.mrf.mxu0
      %1244 = vmatprep.mubr.bf16.mxu0 0
      %1245 = vmatmul.mubr.bf16.gmra.mxu0 %v779
      %v1246 = vpop.f32.mrf.mxu0
      %v1247 = vadd.f32 0.0, %v1246
      %v1248 = vpop.f32.mrf.mxu0
      %v1249 = vpop.f32.mrf.mxu0
      %v1250 = vadd.f32 0.0, %v1249
      %v1251 = vpop.f32.mrf.mxu0
      %1252 = vmatprep.mubr.bf16.mxu0 0
      %1253 = vmatmul.mubr.bf16.gmra.mxu0 %v782
      %v1254 = vpop.f32.mrf.mxu0
      %v1255 = vadd.f32 0.0, %v1254
      %v1256 = vpop.f32.mrf.mxu0
      %v1257 = vpop.f32.mrf.mxu0
      %v1258 = vadd.f32 0.0, %v1257
      %v1259 = vpop.f32.mrf.mxu0
      %1260 = vmatprep.mubr.bf16.mxu0 0
      %1261 = vmatmul.mubr.bf16.gmra.mxu0 %v785
      %v1262 = vpop.f32.mrf.mxu0
      %v1263 = vadd.f32 0.0, %v1262
      %v1264 = vpop.f32.mrf.mxu0
      %v1265 = vpop.f32.mrf.mxu0
      %v1266 = vadd.f32 0.0, %v1265
      %v1267 = vpop.f32.mrf.mxu0
      %1268 = vmatprep.mubr.bf16.mxu0 0
      %1269 = vmatmul.mubr.bf16.gmra.mxu0 %v788
      %v1270 = vpop.f32.mrf.mxu0
      %v1271 = vadd.f32 0.0, %v1270
      %v1272 = vpop.f32.mrf.mxu0
      %v1273 = vpop.f32.mrf.mxu0
      %v1274 = vadd.f32 0.0, %v1273
      %v1275 = vpop.f32.mrf.mxu0
      %1276 = vmatprep.mubr.bf16.mxu0 0
      %1277 = vmatmul.mubr.bf16.gmra.mxu0 %v791
      %v1278 = vpop.f32.mrf.mxu0
      %v1279 = vadd.f32 0.0, %v1278
      %v1280 = vpop.f32.mrf.mxu0
      %v1281 = vpop.f32.mrf.mxu0
      %v1282 = vadd.f32 0.0, %v1281
      %v1283 = vpop.f32.mrf.mxu0
      %1284 = vmatprep.mubr.bf16.mxu0 0
      %1285 = vmatmul.mubr.bf16.gmra.mxu0 %v794
      %v1286 = vpop.f32.mrf.mxu0
      %v1287 = vadd.f32 0.0, %v1286
      %v1288 = vpop.f32.mrf.mxu0
      %v1289 = vpop.f32.mrf.mxu0
      %v1290 = vadd.f32 0.0, %v1289
      %v1291 = vpop.f32.mrf.mxu0
      %1292 = vmatprep.mubr.bf16.mxu0 0
      %1293 = vmatmul.mubr.bf16.gmra.mxu0 %v797
      %v1294 = vpop.f32.mrf.mxu0
      %v1295 = vadd.f32 0.0, %v1294
      %v1296 = vpop.f32.mrf.mxu0
      %v1297 = vpop.f32.mrf.mxu0
      %v1298 = vadd.f32 0.0, %v1297
      %v1299 = vpop.f32.mrf.mxu0
      %1300 = vmatprep.mubr.bf16.mxu0 0
      %1301 = vmatmul.mubr.bf16.gmra.mxu0 %v800
      %v1302 = vpop.f32.mrf.mxu0
      %v1303 = vadd.f32 0.0, %v1302
      %v1304 = vpop.f32.mrf.mxu0
      %v1305 = vpop.f32.mrf.mxu0
      %v1306 = vadd.f32 0.0, %v1305
      %v1307 = vpop.f32.mrf.mxu0
      %1308 = vmatprep.mubr.bf16.mxu0 0
      %1309 = vmatmul.mubr.bf16.gmra.mxu0 %v803
      %v1310 = vpop.f32.mrf.mxu0
      %v1311 = vadd.f32 0.0, %v1310
      %v1312 = vpop.f32.mrf.mxu0
      %v1313 = vpop.f32.mrf.mxu0
      %v1314 = vadd.f32 0.0, %v1313
      %v1315 = vpop.f32.mrf.mxu0
      %1316 = vmatprep.mubr.bf16.mxu0 0
      %1317 = vmatmul.mubr.bf16.gmra.mxu0 %v806
      %v1318 = vpop.f32.mrf.mxu0
      %v1319 = vadd.f32 0.0, %v1318
      %v1320 = vpop.f32.mrf.mxu0
      %v1321 = vpop.f32.mrf.mxu0
      %v1322 = vadd.f32 0.0, %v1321
      %v1323 = vpop.f32.mrf.mxu0
      %1324 = vmatprep.mubr.bf16.mxu0 0
      %1325 = vmatmul.mubr.bf16.gmra.mxu0 %v809
      %v1326 = vpop.f32.mrf.mxu0
      %v1327 = vadd.f32 0.0, %v1326
      %v1328 = vpop.f32.mrf.mxu0
      %v1329 = vpop.f32.mrf.mxu0
      %v1330 = vadd.f32 0.0, %v1329
      %v1331 = vpop.f32.mrf.mxu0
      %1332 = vmatprep.mubr.bf16.mxu0 0
      %1333 = vmatmul.mubr.bf16.gmra.mxu0 %v812
      %v1334 = vpop.f32.mrf.mxu0
      %v1335 = vadd.f32 0.0, %v1334
      %v1336 = vpop.f32.mrf.mxu0
      %v1337 = vpop.f32.mrf.mxu0
      %v1338 = vadd.f32 0.0, %v1337
      %v1339 = vpop.f32.mrf.mxu0
      %1340 = vmatprep.mubr.bf16.mxu0 0
      %1341 = vmatmul.mubr.bf16.gmra.mxu0 %v815
      %v1342 = vpop.f32.mrf.mxu0
      %v1343 = vadd.f32 0.0, %v1342
      %v1344 = vpop.f32.mrf.mxu0
      %v1345 = vpop.f32.mrf.mxu0
      %v1346 = vadd.f32 0.0, %v1345
      %v1347 = vpop.f32.mrf.mxu0
      %1348 = vmatprep.mubr.bf16.mxu0 0
      %1349 = vmatmul.mubr.bf16.gmra.mxu0 %v818
      %v1350 = vpop.f32.mrf.mxu0
      %v1351 = vadd.f32 0.0, %v1350
      %v1352 = vpop.f32.mrf.mxu0
      %v1353 = vpop.f32.mrf.mxu0
      %v1354 = vadd.f32 0.0, %v1353
      %v1355 = vpop.f32.mrf.mxu0
      %1356 = vmatprep.mubr.bf16.mxu0 0
      %1357 = vmatmul.mubr.bf16.gmra.mxu0 %v821
      %v1358 = vpop.f32.mrf.mxu0
      %v1359 = vadd.f32 0.0, %v1358
      %v1360 = vpop.f32.mrf.mxu0
      %v1361 = vpop.f32.mrf.mxu0
      %v1362 = vadd.f32 0.0, %v1361
      %v1363 = vpop.f32.mrf.mxu0
      %1364 = vmatprep.mubr.bf16.mxu0 0
      %1365 = vmatmul.mubr.bf16.gmra.mxu0 %v824
      %v1366 = vpop.f32.mrf.mxu0
      %v1367 = vadd.f32 0.0, %v1366
      %v1368 = vpop.f32.mrf.mxu0
      %v1369 = vpop.f32.mrf.mxu0
      %v1370 = vadd.f32 0.0, %v1369
      %v1371 = vpop.f32.mrf.mxu0
      %1372 = vmatprep.mubr.bf16.mxu0 0
      %1373 = vmatmul.mubr.bf16.gmra.mxu0 %v827
      %v1374 = vpop.f32.mrf.mxu0
      %v1375 = vadd.f32 0.0, %v1374
      %v1376 = vpop.f32.mrf.mxu0
      %v1377 = vpop.f32.mrf.mxu0
      %v1378 = vadd.f32 0.0, %v1377
      %v1379 = vpop.f32.mrf.mxu0
      %1380 = vdwg.mxu0
      %v1382 = vlaneseq
      %v1383 = vshrl.u32 %v1382, 7
      %v1384 = vsub.s32 0, %v1383
      %v1385 = vrot.slane %v172, %v1384
      %v1387 = vadd.f32 %v1385, %v871
      %v1388 = vadd.f32 %v1385, %v874
      %v1389 = vadd.f32 %v1385, %v879
      %v1390 = vadd.f32 %v1385, %v882
      %v1391 = vadd.f32 %v1385, %v887
      %v1392 = vadd.f32 %v1385, %v890
      %v1393 = vadd.f32 %v1385, %v895
      %v1394 = vadd.f32 %v1385, %v898
      %v1395 = vadd.f32 %v1385, %v903
      %v1396 = vadd.f32 %v1385, %v906
      %v1397 = vadd.f32 %v1385, %v911
      %v1398 = vadd.f32 %v1385, %v914
      %v1399 = vadd.f32 %v1385, %v919
      %v1400 = vadd.f32 %v1385, %v922
      %v1401 = vadd.f32 %v1385, %v927
      %v1402 = vadd.f32 %v1385, %v930
      %v1403 = vadd.f32 %v1385, %v935
      %v1404 = vadd.f32 %v1385, %v938
      %v1405 = vadd.f32 %v1385, %v943
      %v1406 = vadd.f32 %v1385, %v946
      %v1407 = vadd.f32 %v1385, %v951
      %v1408 = vadd.f32 %v1385, %v954
      %v1409 = vadd.f32 %v1385, %v959
      %v1410 = vadd.f32 %v1385, %v962
      %v1411 = vadd.f32 %v1385, %v967
      %v1412 = vadd.f32 %v1385, %v970
      %v1413 = vadd.f32 %v1385, %v975
      %v1414 = vadd.f32 %v1385, %v978
      %v1415 = vadd.f32 %v1385, %v983
      %v1416 = vadd.f32 %v1385, %v986
      %v1417 = vadd.f32 %v1385, %v991
      %v1418 = vadd.f32 %v1385, %v994
      %v1419 = vadd.f32 %v1385, %v999
      %v1420 = vadd.f32 %v1385, %v1002
      %v1421 = vadd.f32 %v1385, %v1007
      %v1422 = vadd.f32 %v1385, %v1010
      %v1423 = vadd.f32 %v1385, %v1015
      %v1424 = vadd.f32 %v1385, %v1018
      %v1425 = vadd.f32 %v1385, %v1023
      %v1426 = vadd.f32 %v1385, %v1026
      %v1427 = vadd.f32 %v1385, %v1031
      %v1428 = vadd.f32 %v1385, %v1034
      %v1429 = vadd.f32 %v1385, %v1039
      %v1430 = vadd.f32 %v1385, %v1042
      %v1431 = vadd.f32 %v1385, %v1047
      %v1432 = vadd.f32 %v1385, %v1050
      %v1433 = vadd.f32 %v1385, %v1055
      %v1434 = vadd.f32 %v1385, %v1058
      %v1435 = vadd.f32 %v1385, %v1063
      %v1436 = vadd.f32 %v1385, %v1066
      %v1437 = vadd.f32 %v1385, %v1071
      %v1438 = vadd.f32 %v1385, %v1074
      %v1439 = vadd.f32 %v1385, %v1079
      %v1440 = vadd.f32 %v1385, %v1082
      %v1441 = vadd.f32 %v1385, %v1087
      %v1442 = vadd.f32 %v1385, %v1090
      %v1443 = vadd.f32 %v1385, %v1095
      %v1444 = vadd.f32 %v1385, %v1098
      %v1445 = vadd.f32 %v1385, %v1103
      %v1446 = vadd.f32 %v1385, %v1106
      %v1447 = vadd.f32 %v1385, %v1111
      %v1448 = vadd.f32 %v1385, %v1114
      %v1449 = vadd.f32 %v1385, %v1119
      %v1450 = vadd.f32 %v1385, %v1122
      %v1451 = vadd.f32 %v1385, %v1127
      %v1452 = vadd.f32 %v1385, %v1130
      %v1453 = vadd.f32 %v1385, %v1135
      %v1454 = vadd.f32 %v1385, %v1138
      %v1455 = vadd.f32 %v1385, %v1143
      %v1456 = vadd.f32 %v1385, %v1146
      %v1457 = vadd.f32 %v1385, %v1151
      %v1458 = vadd.f32 %v1385, %v1154
      %v1459 = vadd.f32 %v1385, %v1159
      %v1460 = vadd.f32 %v1385, %v1162
      %v1461 = vadd.f32 %v1385, %v1167
      %v1462 = vadd.f32 %v1385, %v1170
      %v1463 = vadd.f32 %v1385, %v1175
      %v1464 = vadd.f32 %v1385, %v1178
      %v1465 = vadd.f32 %v1385, %v1183
      %v1466 = vadd.f32 %v1385, %v1186
      %v1467 = vadd.f32 %v1385, %v1191
      %v1468 = vadd.f32 %v1385, %v1194
      %v1469 = vadd.f32 %v1385, %v1199
      %v1470 = vadd.f32 %v1385, %v1202
      %v1471 = vadd.f32 %v1385, %v1207
      %v1472 = vadd.f32 %v1385, %v1210
      %v1473 = vadd.f32 %v1385, %v1215
      %v1474 = vadd.f32 %v1385, %v1218
      %v1475 = vadd.f32 %v1385, %v1223
      %v1476 = vadd.f32 %v1385, %v1226
      %v1477 = vadd.f32 %v1385, %v1231
      %v1478 = vadd.f32 %v1385, %v1234
      %v1479 = vadd.f32 %v1385, %v1239
      %v1480 = vadd.f32 %v1385, %v1242
      %v1481 = vadd.f32 %v1385, %v1247
      %v1482 = vadd.f32 %v1385, %v1250
      %v1483 = vadd.f32 %v1385, %v1255
      %v1484 = vadd.f32 %v1385, %v1258
      %v1485 = vadd.f32 %v1385, %v1263
      %v1486 = vadd.f32 %v1385, %v1266
      %v1487 = vadd.f32 %v1385, %v1271
      %v1488 = vadd.f32 %v1385, %v1274
      %v1489 = vadd.f32 %v1385, %v1279
      %v1490 = vadd.f32 %v1385, %v1282
      %v1491 = vadd.f32 %v1385, %v1287
      %v1492 = vadd.f32 %v1385, %v1290
      %v1493 = vadd.f32 %v1385, %v1295
      %v1494 = vadd.f32 %v1385, %v1298
      %v1495 = vadd.f32 %v1385, %v1303
      %v1496 = vadd.f32 %v1385, %v1306
      %v1497 = vadd.f32 %v1385, %v1311
      %v1498 = vadd.f32 %v1385, %v1314
      %v1499 = vadd.f32 %v1385, %v1319
      %v1500 = vadd.f32 %v1385, %v1322
      %v1501 = vadd.f32 %v1385, %v1327
      %v1502 = vadd.f32 %v1385, %v1330
      %v1503 = vadd.f32 %v1385, %v1335
      %v1504 = vadd.f32 %v1385, %v1338
      %v1505 = vadd.f32 %v1385, %v1343
      %v1506 = vadd.f32 %v1385, %v1346
      %v1507 = vadd.f32 %v1385, %v1351
      %v1508 = vadd.f32 %v1385, %v1354
      %v1509 = vadd.f32 %v1385, %v1359
      %v1510 = vadd.f32 %v1385, %v1362
      %v1511 = vadd.f32 %v1385, %v1367
      %v1512 = vadd.f32 %v1385, %v1370
      %v1513 = vadd.f32 %v1385, %v1375
      %v1514 = vadd.f32 %v1385, %v1378
      %v1515 = vmax.f32 %v1387, 0.0
      %v1516 = vmax.f32 %v1388, 0.0
      %v1517 = vmax.f32 %v1389, 0.0
      %v1518 = vmax.f32 %v1390, 0.0
      %v1519 = vmax.f32 %v1391, 0.0
      %v1520 = vmax.f32 %v1392, 0.0
      %v1521 = vmax.f32 %v1393, 0.0
      %v1522 = vmax.f32 %v1394, 0.0
      %v1523 = vmax.f32 %v1395, 0.0
      %v1524 = vmax.f32 %v1396, 0.0
      %v1525 = vmax.f32 %v1397, 0.0
      %v1526 = vmax.f32 %v1398, 0.0
      %v1527 = vmax.f32 %v1399, 0.0
      %v1528 = vmax.f32 %v1400, 0.0
      %v1529 = vmax.f32 %v1401, 0.0
      %v1530 = vmax.f32 %v1402, 0.0
      %v1531 = vmax.f32 %v1403, 0.0
      %v1532 = vmax.f32 %v1404, 0.0
      %v1533 = vmax.f32 %v1405, 0.0
      %v1534 = vmax.f32 %v1406, 0.0
      %v1535 = vmax.f32 %v1407, 0.0
      %v1536 = vmax.f32 %v1408, 0.0
      %v1537 = vmax.f32 %v1409, 0.0
      %v1538 = vmax.f32 %v1410, 0.0
      %v1539 = vmax.f32 %v1411, 0.0
      %v1540 = vmax.f32 %v1412, 0.0
      %v1541 = vmax.f32 %v1413, 0.0
      %v1542 = vmax.f32 %v1414, 0.0
      %v1543 = vmax.f32 %v1415, 0.0
      %v1544 = vmax.f32 %v1416, 0.0
      %v1545 = vmax.f32 %v1417, 0.0
      %v1546 = vmax.f32 %v1418, 0.0
      %v1547 = vmax.f32 %v1419, 0.0
      %v1548 = vmax.f32 %v1420, 0.0
      %v1549 = vmax.f32 %v1421, 0.0
      %v1550 = vmax.f32 %v1422, 0.0
      %v1551 = vmax.f32 %v1423, 0.0
      %v1552 = vmax.f32 %v1424, 0.0
      %v1553 = vmax.f32 %v1425, 0.0
      %v1554 = vmax.f32 %v1426, 0.0
      %v1555 = vmax.f32 %v1427, 0.0
      %v1556 = vmax.f32 %v1428, 0.0
      %v1557 = vmax.f32 %v1429, 0.0
      %v1558 = vmax.f32 %v1430, 0.0
      %v1559 = vmax.f32 %v1431, 0.0
      %v1560 = vmax.f32 %v1432, 0.0
      %v1561 = vmax.f32 %v1433, 0.0
      %v1562 = vmax.f32 %v1434, 0.0
      %v1563 = vmax.f32 %v1435, 0.0
      %v1564 = vmax.f32 %v1436, 0.0
      %v1565 = vmax.f32 %v1437, 0.0
      %v1566 = vmax.f32 %v1438, 0.0
      %v1567 = vmax.f32 %v1439, 0.0
      %v1568 = vmax.f32 %v1440, 0.0
      %v1569 = vmax.f32 %v1441, 0.0
      %v1570 = vmax.f32 %v1442, 0.0
      %v1571 = vmax.f32 %v1443, 0.0
      %v1572 = vmax.f32 %v1444, 0.0
      %v1573 = vmax.f32 %v1445, 0.0
      %v1574 = vmax.f32 %v1446, 0.0
      %v1575 = vmax.f32 %v1447, 0.0
      %v1576 = vmax.f32 %v1448, 0.0
      %v1577 = vmax.f32 %v1449, 0.0
      %v1578 = vmax.f32 %v1450, 0.0
      %v1579 = vmax.f32 %v1451, 0.0
      %v1580 = vmax.f32 %v1452, 0.0
      %v1581 = vmax.f32 %v1453, 0.0
      %v1582 = vmax.f32 %v1454, 0.0
      %v1583 = vmax.f32 %v1455, 0.0
      %v1584 = vmax.f32 %v1456, 0.0
      %v1585 = vmax.f32 %v1457, 0.0
      %v1586 = vmax.f32 %v1458, 0.0
      %v1587 = vmax.f32 %v1459, 0.0
      %v1588 = vmax.f32 %v1460, 0.0
      %v1589 = vmax.f32 %v1461, 0.0
      %v1590 = vmax.f32 %v1462, 0.0
      %v1591 = vmax.f32 %v1463, 0.0
      %v1592 = vmax.f32 %v1464, 0.0
      %v1593 = vmax.f32 %v1465, 0.0
      %v1594 = vmax.f32 %v1466, 0.0
      %v1595 = vmax.f32 %v1467, 0.0
      %v1596 = vmax.f32 %v1468, 0.0
      %v1597 = vmax.f32 %v1469, 0.0
      %v1598 = vmax.f32 %v1470, 0.0
      %v1599 = vmax.f32 %v1471, 0.0
      %v1600 = vmax.f32 %v1472, 0.0
      %v1601 = vmax.f32 %v1473, 0.0
      %v1602 = vmax.f32 %v1474, 0.0
      %v1603 = vmax.f32 %v1475, 0.0
      %v1604 = vmax.f32 %v1476, 0.0
      %v1605 = vmax.f32 %v1477, 0.0
      %v1606 = vmax.f32 %v1478, 0.0
      %v1607 = vmax.f32 %v1479, 0.0
      %v1608 = vmax.f32 %v1480, 0.0
      %v1609 = vmax.f32 %v1481, 0.0
      %v1610 = vmax.f32 %v1482, 0.0
      %v1611 = vmax.f32 %v1483, 0.0
      %v1612 = vmax.f32 %v1484, 0.0
      %v1613 = vmax.f32 %v1485, 0.0
      %v1614 = vmax.f32 %v1486, 0.0
      %v1615 = vmax.f32 %v1487, 0.0
      %v1616 = vmax.f32 %v1488, 0.0
      %v1617 = vmax.f32 %v1489, 0.0
      %v1618 = vmax.f32 %v1490, 0.0
      %v1619 = vmax.f32 %v1491, 0.0
      %v1620 = vmax.f32 %v1492, 0.0
      %v1621 = vmax.f32 %v1493, 0.0
      %v1622 = vmax.f32 %v1494, 0.0
      %v1623 = vmax.f32 %v1495, 0.0
      %v1624 = vmax.f32 %v1496, 0.0
      %v1625 = vmax.f32 %v1497, 0.0
      %v1626 = vmax.f32 %v1498, 0.0
      %v1627 = vmax.f32 %v1499, 0.0
      %v1628 = vmax.f32 %v1500, 0.0
      %v1629 = vmax.f32 %v1501, 0.0
      %v1630 = vmax.f32 %v1502, 0.0
      %v1631 = vmax.f32 %v1503, 0.0
      %v1632 = vmax.f32 %v1504, 0.0
      %v1633 = vmax.f32 %v1505, 0.0
      %v1634 = vmax.f32 %v1506, 0.0
      %v1635 = vmax.f32 %v1507, 0.0
      %v1636 = vmax.f32 %v1508, 0.0
      %v1637 = vmax.f32 %v1509, 0.0
      %v1638 = vmax.f32 %v1510, 0.0
      %v1639 = vmax.f32 %v1511, 0.0
      %v1640 = vmax.f32 %v1512, 0.0
      %v1641 = vmax.f32 %v1513, 0.0
      %v1642 = vmax.f32 %v1514, 0.0
      %v1643 = vpack.c.bf16 %v1516, %v1515
      %v1644 = vpack.c.bf16 %v1518, %v1517
      %v1645 = vpack.c.bf16 %v1520, %v1519
      %v1646 = vpack.c.bf16 %v1522, %v1521
      %v1647 = vpack.c.bf16 %v1524, %v1523
      %v1648 = vpack.c.bf16 %v1526, %v1525
      %v1649 = vpack.c.bf16 %v1528, %v1527
      %v1650 = vpack.c.bf16 %v1530, %v1529
      %v1651 = vpack.c.bf16 %v1532, %v1531
      %v1652 = vpack.c.bf16 %v1534, %v1533
      %v1653 = vpack.c.bf16 %v1536, %v1535
      %v1654 = vpack.c.bf16 %v1538, %v1537
      %v1655 = vpack.c.bf16 %v1540, %v1539
      %v1656 = vpack.c.bf16 %v1542, %v1541
      %v1657 = vpack.c.bf16 %v1544, %v1543
      %v1658 = vpack.c.bf16 %v1546, %v1545
      %v1659 = vpack.c.bf16 %v1548, %v1547
      %v1660 = vpack.c.bf16 %v1550, %v1549
      %v1661 = vpack.c.bf16 %v1552, %v1551
      %v1662 = vpack.c.bf16 %v1554, %v1553
      %v1663 = vpack.c.bf16 %v1556, %v1555
      %v1664 = vpack.c.bf16 %v1558, %v1557
      %v1665 = vpack.c.bf16 %v1560, %v1559
      %v1666 = vpack.c.bf16 %v1562, %v1561
      %v1667 = vpack.c.bf16 %v1564, %v1563
      %v1668 = vpack.c.bf16 %v1566, %v1565
      %v1669 = vpack.c.bf16 %v1568, %v1567
      %v1670 = vpack.c.bf16 %v1570, %v1569
      %v1671 = vpack.c.bf16 %v1572, %v1571
      %v1672 = vpack.c.bf16 %v1574, %v1573
      %v1673 = vpack.c.bf16 %v1576, %v1575
      %v1674 = vpack.c.bf16 %v1578, %v1577
      %v1675 = vpack.c.bf16 %v1580, %v1579
      %v1676 = vpack.c.bf16 %v1582, %v1581
      %v1677 = vpack.c.bf16 %v1584, %v1583
      %v1678 = vpack.c.bf16 %v1586, %v1585
      %v1679 = vpack.c.bf16 %v1588, %v1587
      %v1680 = vpack.c.bf16 %v1590, %v1589
      %v1681 = vpack.c.bf16 %v1592, %v1591
      %v1682 = vpack.c.bf16 %v1594, %v1593
      %v1683 = vpack.c.bf16 %v1596, %v1595
      %v1684 = vpack.c.bf16 %v1598, %v1597
      %v1685 = vpack.c.bf16 %v1600, %v1599
      %v1686 = vpack.c.bf16 %v1602, %v1601
      %v1687 = vpack.c.bf16 %v1604, %v1603
      %v1688 = vpack.c.bf16 %v1606, %v1605
      %v1689 = vpack.c.bf16 %v1608, %v1607
      %v1690 = vpack.c.bf16 %v1610, %v1609
      %v1691 = vpack.c.bf16 %v1612, %v1611
      %v1692 = vpack.c.bf16 %v1614, %v1613
      %v1693 = vpack.c.bf16 %v1616, %v1615
      %v1694 = vpack.c.bf16 %v1618, %v1617
      %v1695 = vpack.c.bf16 %v1620, %v1619
      %v1696 = vpack.c.bf16 %v1622, %v1621
      %v1697 = vpack.c.bf16 %v1624, %v1623
      %v1698 = vpack.c.bf16 %v1626, %v1625
      %v1699 = vpack.c.bf16 %v1628, %v1627
      %v1700 = vpack.c.bf16 %v1630, %v1629
      %v1701 = vpack.c.bf16 %v1632, %v1631
      %v1702 = vpack.c.bf16 %v1634, %v1633
      %v1703 = vpack.c.bf16 %v1636, %v1635
      %v1704 = vpack.c.bf16 %v1638, %v1637
      %v1705 = vpack.c.bf16 %v1640, %v1639
      %v1706 = vpack.c.bf16 %v1642, %v1641
      %v1771 = vunpack.c.l.b16 %v1643
      %v1772 = vunpack.c.h.b16 %v1643
      %v1773 = vunpack.c.l.b16 %v1644
      %v1774 = vunpack.c.h.b16 %v1644
      %v1775 = vunpack.c.l.b16 %v1645
      %v1776 = vunpack.c.h.b16 %v1645
      %v1777 = vunpack.c.l.b16 %v1646
      %v1778 = vunpack.c.h.b16 %v1646
      %v1779 = vunpack.c.l.b16 %v1647
      %v1780 = vunpack.c.h.b16 %v1647
      %v1781 = vunpack.c.l.b16 %v1648
      %v1782 = vunpack.c.h.b16 %v1648
      %v1783 = vunpack.c.l.b16 %v1649
      %v1784 = vunpack.c.h.b16 %v1649
      %v1785 = vunpack.c.l.b16 %v1650
      %v1786 = vunpack.c.h.b16 %v1650
      %v1787 = vunpack.c.l.b16 %v1651
      %v1788 = vunpack.c.h.b16 %v1651
      %v1789 = vunpack.c.l.b16 %v1652
      %v1790 = vunpack.c.h.b16 %v1652
      %v1791 = vunpack.c.l.b16 %v1653
      %v1792 = vunpack.c.h.b16 %v1653
      %v1793 = vunpack.c.l.b16 %v1654
      %v1794 = vunpack.c.h.b16 %v1654
      %v1795 = vunpack.c.l.b16 %v1655
      %v1796 = vunpack.c.h.b16 %v1655
      %v1797 = vunpack.c.l.b16 %v1656
      %v1798 = vunpack.c.h.b16 %v1656
      %v1799 = vunpack.c.l.b16 %v1657
      %v1800 = vunpack.c.h.b16 %v1657
      %v1801 = vunpack.c.l.b16 %v1658
      %v1802 = vunpack.c.h.b16 %v1658
      %v1803 = vunpack.c.l.b16 %v1659
      %v1804 = vunpack.c.h.b16 %v1659
      %v1805 = vunpack.c.l.b16 %v1660
      %v1806 = vunpack.c.h.b16 %v1660
      %v1807 = vunpack.c.l.b16 %v1661
      %v1808 = vunpack.c.h.b16 %v1661
      %v1809 = vunpack.c.l.b16 %v1662
      %v1810 = vunpack.c.h.b16 %v1662
      %v1811 = vunpack.c.l.b16 %v1663
      %v1812 = vunpack.c.h.b16 %v1663
      %v1813 = vunpack.c.l.b16 %v1664
      %v1814 = vunpack.c.h.b16 %v1664
      %v1815 = vunpack.c.l.b16 %v1665
      %v1816 = vunpack.c.h.b16 %v1665
      %v1817 = vunpack.c.l.b16 %v1666
      %v1818 = vunpack.c.h.b16 %v1666
      %v1819 = vunpack.c.l.b16 %v1667
      %v1820 = vunpack.c.h.b16 %v1667
      %v1821 = vunpack.c.l.b16 %v1668
      %v1822 = vunpack.c.h.b16 %v1668
      %v1823 = vunpack.c.l.b16 %v1669
      %v1824 = vunpack.c.h.b16 %v1669
      %v1825 = vunpack.c.l.b16 %v1670
      %v1826 = vunpack.c.h.b16 %v1670
      %v1827 = vunpack.c.l.b16 %v1671
      %v1828 = vunpack.c.h.b16 %v1671
      %v1829 = vunpack.c.l.b16 %v1672
      %v1830 = vunpack.c.h.b16 %v1672
      %v1831 = vunpack.c.l.b16 %v1673
      %v1832 = vunpack.c.h.b16 %v1673
      %v1833 = vunpack.c.l.b16 %v1674
      %v1834 = vunpack.c.h.b16 %v1674
      %v1835 = vunpack.c.l.b16 %v1675
      %v1836 = vunpack.c.h.b16 %v1675
      %v1837 = vunpack.c.l.b16 %v1676
      %v1838 = vunpack.c.h.b16 %v1676
      %v1839 = vunpack.c.l.b16 %v1677
      %v1840 = vunpack.c.h.b16 %v1677
      %v1841 = vunpack.c.l.b16 %v1678
      %v1842 = vunpack.c.h.b16 %v1678
      %v1843 = vunpack.c.l.b16 %v1679
      %v1844 = vunpack.c.h.b16 %v1679
      %v1845 = vunpack.c.l.b16 %v1680
      %v1846 = vunpack.c.h.b16 %v1680
      %v1847 = vunpack.c.l.b16 %v1681
      %v1848 = vunpack.c.h.b16 %v1681
      %v1849 = vunpack.c.l.b16 %v1682
      %v1850 = vunpack.c.h.b16 %v1682
      %v1851 = vunpack.c.l.b16 %v1683
      %v1852 = vunpack.c.h.b16 %v1683
      %v1853 = vunpack.c.l.b16 %v1684
      %v1854 = vunpack.c.h.b16 %v1684
      %v1855 = vunpack.c.l.b16 %v1685
      %v1856 = vunpack.c.h.b16 %v1685
      %v1857 = vunpack.c.l.b16 %v1686
      %v1858 = vunpack.c.h.b16 %v1686
      %v1859 = vunpack.c.l.b16 %v1687
      %v1860 = vunpack.c.h.b16 %v1687
      %v1861 = vunpack.c.l.b16 %v1688
      %v1862 = vunpack.c.h.b16 %v1688
      %v1863 = vunpack.c.l.b16 %v1689
      %v1864 = vunpack.c.h.b16 %v1689
      %v1865 = vunpack.c.l.b16 %v1690
      %v1866 = vunpack.c.h.b16 %v1690
      %v1867 = vunpack.c.l.b16 %v1691
      %v1868 = vunpack.c.h.b16 %v1691
      %v1869 = vunpack.c.l.b16 %v1692
      %v1870 = vunpack.c.h.b16 %v1692
      %v1871 = vunpack.c.l.b16 %v1693
      %v1872 = vunpack.c.h.b16 %v1693
      %v1873 = vunpack.c.l.b16 %v1694
      %v1874 = vunpack.c.h.b16 %v1694
      %v1875 = vunpack.c.l.b16 %v1695
      %v1876 = vunpack.c.h.b16 %v1695
      %v1877 = vunpack.c.l.b16 %v1696
      %v1878 = vunpack.c.h.b16 %v1696
      %v1879 = vunpack.c.l.b16 %v1697
      %v1880 = vunpack.c.h.b16 %v1697
      %v1881 = vunpack.c.l.b16 %v1698
      %v1882 = vunpack.c.h.b16 %v1698
      %v1883 = vunpack.c.l.b16 %v1699
      %v1884 = vunpack.c.h.b16 %v1699
      %v1885 = vunpack.c.l.b16 %v1700
      %v1886 = vunpack.c.h.b16 %v1700
      %v1887 = vunpack.c.l.b16 %v1701
      %v1888 = vunpack.c.h.b16 %v1701
      %v1889 = vunpack.c.l.b16 %v1702
      %v1890 = vunpack.c.h.b16 %v1702
      %v1891 = vunpack.c.l.b16 %v1703
      %v1892 = vunpack.c.h.b16 %v1703
      %v1893 = vunpack.c.l.b16 %v1704
      %v1894 = vunpack.c.h.b16 %v1704
      %v1895 = vunpack.c.l.b16 %v1705
      %v1896 = vunpack.c.h.b16 %v1705
      %v1897 = vunpack.c.l.b16 %v1706
      %v1898 = vunpack.c.h.b16 %v1706
      %v1899 = vpack.c.b16 %v1771, %v1771
      %v1900 = vpack.c.b16 %v1772, %v1772
      %v1901 = vpack.c.b16 %v1773, %v1773
      %v1902 = vpack.c.b16 %v1774, %v1774
      %v1903 = vpack.c.b16 %v1775, %v1775
      %v1904 = vpack.c.b16 %v1776, %v1776
      %v1905 = vpack.c.b16 %v1777, %v1777
      %v1906 = vpack.c.b16 %v1778, %v1778
      %v1907 = vpack.c.b16 %v1779, %v1779
      %v1908 = vpack.c.b16 %v1780, %v1780
      %v1909 = vpack.c.b16 %v1781, %v1781
      %v1910 = vpack.c.b16 %v1782, %v1782
      %v1911 = vpack.c.b16 %v1783, %v1783
      %v1912 = vpack.c.b16 %v1784, %v1784
      %v1913 = vpack.c.b16 %v1785, %v1785
      %v1914 = vpack.c.b16 %v1786, %v1786
      %v1915 = vpack.c.b16 %v1787, %v1787
      %v1916 = vpack.c.b16 %v1788, %v1788
      %v1917 = vpack.c.b16 %v1789, %v1789
      %v1918 = vpack.c.b16 %v1790, %v1790
      %v1919 = vpack.c.b16 %v1791, %v1791
      %v1920 = vpack.c.b16 %v1792, %v1792
      %v1921 = vpack.c.b16 %v1793, %v1793
      %v1922 = vpack.c.b16 %v1794, %v1794
      %v1923 = vpack.c.b16 %v1795, %v1795
      %v1924 = vpack.c.b16 %v1796, %v1796
      %v1925 = vpack.c.b16 %v1797, %v1797
      %v1926 = vpack.c.b16 %v1798, %v1798
      %v1927 = vpack.c.b16 %v1799, %v1799
      %v1928 = vpack.c.b16 %v1800, %v1800
      %v1929 = vpack.c.b16 %v1801, %v1801
      %v1930 = vpack.c.b16 %v1802, %v1802
      %v1931 = vpack.c.b16 %v1803, %v1803
      %v1932 = vpack.c.b16 %v1804, %v1804
      %v1933 = vpack.c.b16 %v1805, %v1805
      %v1934 = vpack.c.b16 %v1806, %v1806
      %v1935 = vpack.c.b16 %v1807, %v1807
      %v1936 = vpack.c.b16 %v1808, %v1808
      %v1937 = vpack.c.b16 %v1809, %v1809
      %v1938 = vpack.c.b16 %v1810, %v1810
      %v1939 = vpack.c.b16 %v1811, %v1811
      %v1940 = vpack.c.b16 %v1812, %v1812
      %v1941 = vpack.c.b16 %v1813, %v1813
      %v1942 = vpack.c.b16 %v1814, %v1814
      %v1943 = vpack.c.b16 %v1815, %v1815
      %v1944 = vpack.c.b16 %v1816, %v1816
      %v1945 = vpack.c.b16 %v1817, %v1817
      %v1946 = vpack.c.b16 %v1818, %v1818
      %v1947 = vpack.c.b16 %v1819, %v1819
      %v1948 = vpack.c.b16 %v1820, %v1820
      %v1949 = vpack.c.b16 %v1821, %v1821
      %v1950 = vpack.c.b16 %v1822, %v1822
      %v1951 = vpack.c.b16 %v1823, %v1823
      %v1952 = vpack.c.b16 %v1824, %v1824
      %v1953 = vpack.c.b16 %v1825, %v1825
      %v1954 = vpack.c.b16 %v1826, %v1826
      %v1955 = vpack.c.b16 %v1827, %v1827
      %v1956 = vpack.c.b16 %v1828, %v1828
      %v1957 = vpack.c.b16 %v1829, %v1829
      %v1958 = vpack.c.b16 %v1830, %v1830
      %v1959 = vpack.c.b16 %v1831, %v1831
      %v1960 = vpack.c.b16 %v1832, %v1832
      %v1961 = vpack.c.b16 %v1833, %v1833
      %v1962 = vpack.c.b16 %v1834, %v1834
      %v1963 = vpack.c.b16 %v1835, %v1835
      %v1964 = vpack.c.b16 %v1836, %v1836
      %v1965 = vpack.c.b16 %v1837, %v1837
      %v1966 = vpack.c.b16 %v1838, %v1838
      %v1967 = vpack.c.b16 %v1839, %v1839
      %v1968 = vpack.c.b16 %v1840, %v1840
      %v1969 = vpack.c.b16 %v1841, %v1841
      %v1970 = vpack.c.b16 %v1842, %v1842
      %v1971 = vpack.c.b16 %v1843, %v1843
      %v1972 = vpack.c.b16 %v1844, %v1844
      %v1973 = vpack.c.b16 %v1845, %v1845
      %v1974 = vpack.c.b16 %v1846, %v1846
      %v1975 = vpack.c.b16 %v1847, %v1847
      %v1976 = vpack.c.b16 %v1848, %v1848
      %v1977 = vpack.c.b16 %v1849, %v1849
      %v1978 = vpack.c.b16 %v1850, %v1850
      %v1979 = vpack.c.b16 %v1851, %v1851
      %v1980 = vpack.c.b16 %v1852, %v1852
      %v1981 = vpack.c.b16 %v1853, %v1853
      %v1982 = vpack.c.b16 %v1854, %v1854
      %v1983 = vpack.c.b16 %v1855, %v1855
      %v1984 = vpack.c.b16 %v1856, %v1856
      %v1985 = vpack.c.b16 %v1857, %v1857
      %v1986 = vpack.c.b16 %v1858, %v1858
      %v1987 = vpack.c.b16 %v1859, %v1859
      %v1988 = vpack.c.b16 %v1860, %v1860
      %v1989 = vpack.c.b16 %v1861, %v1861
      %v1990 = vpack.c.b16 %v1862, %v1862
      %v1991 = vpack.c.b16 %v1863, %v1863
      %v1992 = vpack.c.b16 %v1864, %v1864
      %v1993 = vpack.c.b16 %v1865, %v1865
      %v1994 = vpack.c.b16 %v1866, %v1866
      %v1995 = vpack.c.b16 %v1867, %v1867
      %v1996 = vpack.c.b16 %v1868, %v1868
      %v1997 = vpack.c.b16 %v1869, %v1869
      %v1998 = vpack.c.b16 %v1870, %v1870
      %v1999 = vpack.c.b16 %v1871, %v1871
      %v2000 = vpack.c.b16 %v1872, %v1872
      %v2001 = vpack.c.b16 %v1873, %v1873
      %v2002 = vpack.c.b16 %v1874, %v1874
      %v2003 = vpack.c.b16 %v1875, %v1875
      %v2004 = vpack.c.b16 %v1876, %v1876
      %v2005 = vpack.c.b16 %v1877, %v1877
      %v2006 = vpack.c.b16 %v1878, %v1878
      %v2007 = vpack.c.b16 %v1879, %v1879
      %v2008 = vpack.c.b16 %v1880, %v1880
      %v2009 = vpack.c.b16 %v1881, %v1881
      %v2010 = vpack.c.b16 %v1882, %v1882
      %v2011 = vpack.c.b16 %v1883, %v1883
      %v2012 = vpack.c.b16 %v1884, %v1884
      %v2013 = vpack.c.b16 %v1885, %v1885
      %v2014 = vpack.c.b16 %v1886, %v1886
      %v2015 = vpack.c.b16 %v1887, %v1887
      %v2016 = vpack.c.b16 %v1888, %v1888
      %v2017 = vpack.c.b16 %v1889, %v1889
      %v2018 = vpack.c.b16 %v1890, %v1890
      %v2019 = vpack.c.b16 %v1891, %v1891
      %v2020 = vpack.c.b16 %v1892, %v1892
      %v2021 = vpack.c.b16 %v1893, %v1893
      %v2022 = vpack.c.b16 %v1894, %v1894
      %v2023 = vpack.c.b16 %v1895, %v1895
      %v2024 = vpack.c.b16 %v1896, %v1896
      %v2025 = vpack.c.b16 %v1897, %v1897
      %v2026 = vpack.c.b16 %v1898, %v1898
      %vm2155 = vcmask 519168
      %2156 = vst.msk [vmem:[%s170] sm:$0xf] %vm2155, %v1899
      %2157 = vst.msk [vmem:[%s170 + $0x4] sm:$0xf] %vm2155, %v1900
      %2158 = vst.msk [vmem:[%s170 + $0x8] sm:$0xf] %vm2155, %v1901
      %2159 = vst.msk [vmem:[%s170 + $0xc] sm:$0xf] %vm2155, %v1902
      %2160 = vst.msk [vmem:[%s170 + $0x10] sm:$0xf] %vm2155, %v1903
      %2161 = vst.msk [vmem:[%s170 + $0x14] sm:$0xf] %vm2155, %v1904
      %2162 = vst.msk [vmem:[%s170 + $0x18] sm:$0xf] %vm2155, %v1905
      %2163 = vst.msk [vmem:[%s170 + $0x1c] sm:$0xf] %vm2155, %v1906
      %2164 = vst.msk [vmem:[%s170 + $0x20] sm:$0xf] %vm2155, %v1907
      %2165 = vst.msk [vmem:[%s170 + $0x24] sm:$0xf] %vm2155, %v1908
      %2166 = vst.msk [vmem:[%s170 + $0x28] sm:$0xf] %vm2155, %v1909
      %2167 = vst.msk [vmem:[%s170 + $0x2c] sm:$0xf] %vm2155, %v1910
      %2168 = vst.msk [vmem:[%s170 + $0x30] sm:$0xf] %vm2155, %v1911
      %2169 = vst.msk [vmem:[%s170 + $0x34] sm:$0xf] %vm2155, %v1912
      %2170 = vst.msk [vmem:[%s170 + $0x38] sm:$0xf] %vm2155, %v1913
      %2171 = vst.msk [vmem:[%s170 + $0x3c] sm:$0xf] %vm2155, %v1914
      %2172 = vst.msk [vmem:[%s170 + $0x40] sm:$0xf] %vm2155, %v1915
      %2173 = vst.msk [vmem:[%s170 + $0x44] sm:$0xf] %vm2155, %v1916
      %2174 = vst.msk [vmem:[%s170 + $0x48] sm:$0xf] %vm2155, %v1917
      %2175 = vst.msk [vmem:[%s170 + $0x4c] sm:$0xf] %vm2155, %v1918
      %2176 = vst.msk [vmem:[%s170 + $0x50] sm:$0xf] %vm2155, %v1919
      %2177 = vst.msk [vmem:[%s170 + $0x54] sm:$0xf] %vm2155, %v1920
      %2178 = vst.msk [vmem:[%s170 + $0x58] sm:$0xf] %vm2155, %v1921
      %2179 = vst.msk [vmem:[%s170 + $0x5c] sm:$0xf] %vm2155, %v1922
      %2180 = vst.msk [vmem:[%s170 + $0x60] sm:$0xf] %vm2155, %v1923
      %2181 = vst.msk [vmem:[%s170 + $0x64] sm:$0xf] %vm2155, %v1924
      %2182 = vst.msk [vmem:[%s170 + $0x68] sm:$0xf] %vm2155, %v1925
      %2183 = vst.msk [vmem:[%s170 + $0x6c] sm:$0xf] %vm2155, %v1926
      %2184 = vst.msk [vmem:[%s170 + $0x70] sm:$0xf] %vm2155, %v1927
      %2185 = vst.msk [vmem:[%s170 + $0x74] sm:$0xf] %vm2155, %v1928
      %2186 = vst.msk [vmem:[%s170 + $0x78] sm:$0xf] %vm2155, %v1929
      %2187 = vst.msk [vmem:[%s170 + $0x7c] sm:$0xf] %vm2155, %v1930
      %2188 = vst.msk [vmem:[%s170 + $0x80] sm:$0xf] %vm2155, %v1931
      %2189 = vst.msk [vmem:[%s170 + $0x84] sm:$0xf] %vm2155, %v1932
      %2190 = vst.msk [vmem:[%s170 + $0x88] sm:$0xf] %vm2155, %v1933
      %2191 = vst.msk [vmem:[%s170 + $0x8c] sm:$0xf] %vm2155, %v1934
      %2192 = vst.msk [vmem:[%s170 + $0x90] sm:$0xf] %vm2155, %v1935
      %2193 = vst.msk [vmem:[%s170 + $0x94] sm:$0xf] %vm2155, %v1936
      %2194 = vst.msk [vmem:[%s170 + $0x98] sm:$0xf] %vm2155, %v1937
      %2195 = vst.msk [vmem:[%s170 + $0x9c] sm:$0xf] %vm2155, %v1938
      %2196 = vst.msk [vmem:[%s170 + $0xa0] sm:$0xf] %vm2155, %v1939
      %2197 = vst.msk [vmem:[%s170 + $0xa4] sm:$0xf] %vm2155, %v1940
      %2198 = vst.msk [vmem:[%s170 + $0xa8] sm:$0xf] %vm2155, %v1941
      %2199 = vst.msk [vmem:[%s170 + $0xac] sm:$0xf] %vm2155, %v1942
      %2200 = vst.msk [vmem:[%s170 + $0xb0] sm:$0xf] %vm2155, %v1943
      %2201 = vst.msk [vmem:[%s170 + $0xb4] sm:$0xf] %vm2155, %v1944
      %2202 = vst.msk [vmem:[%s170 + $0xb8] sm:$0xf] %vm2155, %v1945
      %2203 = vst.msk [vmem:[%s170 + $0xbc] sm:$0xf] %vm2155, %v1946
      %2204 = vst.msk [vmem:[%s170 + $0xc0] sm:$0xf] %vm2155, %v1947
      %2205 = vst.msk [vmem:[%s170 + $0xc4] sm:$0xf] %vm2155, %v1948
      %2206 = vst.msk [vmem:[%s170 + $0xc8] sm:$0xf] %vm2155, %v1949
      %2207 = vst.msk [vmem:[%s170 + $0xcc] sm:$0xf] %vm2155, %v1950
      %2208 = vst.msk [vmem:[%s170 + $0xd0] sm:$0xf] %vm2155, %v1951
      %2209 = vst.msk [vmem:[%s170 + $0xd4] sm:$0xf] %vm2155, %v1952
      %2210 = vst.msk [vmem:[%s170 + $0xd8] sm:$0xf] %vm2155, %v1953
      %2211 = vst.msk [vmem:[%s170 + $0xdc] sm:$0xf] %vm2155, %v1954
      %2212 = vst.msk [vmem:[%s170 + $0xe0] sm:$0xf] %vm2155, %v1955
      %2213 = vst.msk [vmem:[%s170 + $0xe4] sm:$0xf] %vm2155, %v1956
      %2214 = vst.msk [vmem:[%s170 + $0xe8] sm:$0xf] %vm2155, %v1957
      %2215 = vst.msk [vmem:[%s170 + $0xec] sm:$0xf] %vm2155, %v1958
      %2216 = vst.msk [vmem:[%s170 + $0xf0] sm:$0xf] %vm2155, %v1959
      %2217 = vst.msk [vmem:[%s170 + $0xf4] sm:$0xf] %vm2155, %v1960
      %2218 = vst.msk [vmem:[%s170 + $0xf8] sm:$0xf] %vm2155, %v1961
      %2219 = vst.msk [vmem:[%s170 + $0xfc] sm:$0xf] %vm2155, %v1962
      %2220 = vst.msk [vmem:[%s170 + $0x100] sm:$0xf] %vm2155, %v1963
      %2221 = vst.msk [vmem:[%s170 + $0x104] sm:$0xf] %vm2155, %v1964
      %2222 = vst.msk [vmem:[%s170 + $0x108] sm:$0xf] %vm2155, %v1965
      %2223 = vst.msk [vmem:[%s170 + $0x10c] sm:$0xf] %vm2155, %v1966
      %2224 = vst.msk [vmem:[%s170 + $0x110] sm:$0xf] %vm2155, %v1967
      %2225 = vst.msk [vmem:[%s170 + $0x114] sm:$0xf] %vm2155, %v1968
      %2226 = vst.msk [vmem:[%s170 + $0x118] sm:$0xf] %vm2155, %v1969
      %2227 = vst.msk [vmem:[%s170 + $0x11c] sm:$0xf] %vm2155, %v1970
      %2228 = vst.msk [vmem:[%s170 + $0x120] sm:$0xf] %vm2155, %v1971
      %2229 = vst.msk [vmem:[%s170 + $0x124] sm:$0xf] %vm2155, %v1972
      %2230 = vst.msk [vmem:[%s170 + $0x128] sm:$0xf] %vm2155, %v1973
      %2231 = vst.msk [vmem:[%s170 + $0x12c] sm:$0xf] %vm2155, %v1974
      %2232 = vst.msk [vmem:[%s170 + $0x130] sm:$0xf] %vm2155, %v1975
      %2233 = vst.msk [vmem:[%s170 + $0x134] sm:$0xf] %vm2155, %v1976
      %2234 = vst.msk [vmem:[%s170 + $0x138] sm:$0xf] %vm2155, %v1977
      %2235 = vst.msk [vmem:[%s170 + $0x13c] sm:$0xf] %vm2155, %v1978
      %2236 = vst.msk [vmem:[%s170 + $0x140] sm:$0xf] %vm2155, %v1979
      %2237 = vst.msk [vmem:[%s170 + $0x144] sm:$0xf] %vm2155, %v1980
      %2238 = vst.msk [vmem:[%s170 + $0x148] sm:$0xf] %vm2155, %v1981
      %2239 = vst.msk [vmem:[%s170 + $0x14c] sm:$0xf] %vm2155, %v1982
      %2240 = vst.msk [vmem:[%s170 + $0x150] sm:$0xf] %vm2155, %v1983
      %2241 = vst.msk [vmem:[%s170 + $0x154] sm:$0xf] %vm2155, %v1984
      %2242 = vst.msk [vmem:[%s170 + $0x158] sm:$0xf] %vm2155, %v1985
      %2243 = vst.msk [vmem:[%s170 + $0x15c] sm:$0xf] %vm2155, %v1986
      %2244 = vst.msk [vmem:[%s170 + $0x160] sm:$0xf] %vm2155, %v1987
      %2245 = vst.msk [vmem:[%s170 + $0x164] sm:$0xf] %vm2155, %v1988
      %2246 = vst.msk [vmem:[%s170 + $0x168] sm:$0xf] %vm2155, %v1989
      %2247 = vst.msk [vmem:[%s170 + $0x16c] sm:$0xf] %vm2155, %v1990
      %2248 = vst.msk [vmem:[%s170 + $0x170] sm:$0xf] %vm2155, %v1991
      %2249 = vst.msk [vmem:[%s170 + $0x174] sm:$0xf] %vm2155, %v1992
      %2250 = vst.msk [vmem:[%s170 + $0x178] sm:$0xf] %vm2155, %v1993
      %2251 = vst.msk [vmem:[%s170 + $0x17c] sm:$0xf] %vm2155, %v1994
      %2252 = vst.msk [vmem:[%s170 + $0x180] sm:$0xf] %vm2155, %v1995
      %2253 = vst.msk [vmem:[%s170 + $0x184] sm:$0xf] %vm2155, %v1996
      %2254 = vst.msk [vmem:[%s170 + $0x188] sm:$0xf] %vm2155, %v1997
      %2255 = vst.msk [vmem:[%s170 + $0x18c] sm:$0xf] %vm2155, %v1998
      %2256 = vst.msk [vmem:[%s170 + $0x190] sm:$0xf] %vm2155, %v1999
      %2257 = vst.msk [vmem:[%s170 + $0x194] sm:$0xf] %vm2155, %v2000
      %2258 = vst.msk [vmem:[%s170 + $0x198] sm:$0xf] %vm2155, %v2001
      %2259 = vst.msk [vmem:[%s170 + $0x19c] sm:$0xf] %vm2155, %v2002
      %2260 = vst.msk [vmem:[%s170 + $0x1a0] sm:$0xf] %vm2155, %v2003
      %2261 = vst.msk [vmem:[%s170 + $0x1a4] sm:$0xf] %vm2155, %v2004
      %2262 = vst.msk [vmem:[%s170 + $0x1a8] sm:$0xf] %vm2155, %v2005
      %2263 = vst.msk [vmem:[%s170 + $0x1ac] sm:$0xf] %vm2155, %v2006
      %2264 = vst.msk [vmem:[%s170 + $0x1b0] sm:$0xf] %vm2155, %v2007
      %2265 = vst.msk [vmem:[%s170 + $0x1b4] sm:$0xf] %vm2155, %v2008
      %2266 = vst.msk [vmem:[%s170 + $0x1b8] sm:$0xf] %vm2155, %v2009
      %2267 = vst.msk [vmem:[%s170 + $0x1bc] sm:$0xf] %vm2155, %v2010
      %2268 = vst.msk [vmem:[%s170 + $0x1c0] sm:$0xf] %vm2155, %v2011
      %2269 = vst.msk [vmem:[%s170 + $0x1c4] sm:$0xf] %vm2155, %v2012
      %2270 = vst.msk [vmem:[%s170 + $0x1c8] sm:$0xf] %vm2155, %v2013
      %2271 = vst.msk [vmem:[%s170 + $0x1cc] sm:$0xf] %vm2155, %v2014
      %2272 = vst.msk [vmem:[%s170 + $0x1d0] sm:$0xf] %vm2155, %v2015
      %2273 = vst.msk [vmem:[%s170 + $0x1d4] sm:$0xf] %vm2155, %v2016
      %2274 = vst.msk [vmem:[%s170 + $0x1d8] sm:$0xf] %vm2155, %v2017
      %2275 = vst.msk [vmem:[%s170 + $0x1dc] sm:$0xf] %vm2155, %v2018
      %2276 = vst.msk [vmem:[%s170 + $0x1e0] sm:$0xf] %vm2155, %v2019
      %2277 = vst.msk [vmem:[%s170 + $0x1e4] sm:$0xf] %vm2155, %v2020
      %2278 = vst.msk [vmem:[%s170 + $0x1e8] sm:$0xf] %vm2155, %v2021
      %2279 = vst.msk [vmem:[%s170 + $0x1ec] sm:$0xf] %vm2155, %v2022
      %2280 = vst.msk [vmem:[%s170 + $0x1f0] sm:$0xf] %vm2155, %v2023
      %2281 = vst.msk [vmem:[%s170 + $0x1f4] sm:$0xf] %vm2155, %v2024
      %2282 = vst.msk [vmem:[%s170 + $0x1f8] sm:$0xf] %vm2155, %v2025
      %2283 = vst.msk [vmem:[%s170 + $0x1fc] sm:$0xf] %vm2155, %v2026
      %p2284 = scmp.lt.s32.totalorder %s14, 1
      %s2285 = scalar_select %p2284, %s14, 1
      %s2286 = smul.addr %s2285, 128
      %s2287 = smul.addr %s2286, 4
      %s2288 = scalar_lea.vmem %s3, %s2287
      // Predicated region
      $region33: #{tpu_custom_call.1} parent=31 // pred_check
        %p2289 = pneg %p100
      $region34: #{tpu_custom_call.1} parent=31 // pred_check_branch
        %2291 = sbr.rel (%p2289) target = $region36
      $region35: #{tpu_custom_call.1} parent=31 // pred_region
        _
      $region36: #{tpu_custom_call.1} parent=31 // pred_fallthru
        _
    $region32: #{tpu_custom_call.1} parent=5 // pred_fallthru
      _
    %p2292 = scmp.le.s32.totalorder 2, %s9
    // Predicated region
    $region37: #{tpu_custom_call.1} parent=5 // pred_check
      %p2293 = pneg %p2292
    $region38: #{tpu_custom_call.1} parent=5 // pred_check_branch
      %2295 = sbr.rel (%p2293) target = $region40
    $region39: #{tpu_custom_call.1} parent=5 // pred_region
      %s2296 = ssub.s32 %s9, 2
      // Predicated region
      $region41: #{tpu_custom_call.1} parent=39 // pred_check
        %p2297 = pneg %p106
      $region42: #{tpu_custom_call.1} parent=39 // pred_check_branch
        %2299 = sbr.rel (%p2297) target = $region44
      $region43: #{tpu_custom_call.1} parent=39 // pred_region
        %p2300 = scmp.lt.s32.totalorder %s15, 1
        %s2301 = scalar_select %p2300, %s15, 1
        %s2302 = smul.addr %s2301, 128
        %s2303 = smul.addr %s2302, 4
        %s2304 = scalar_lea.vmem %s3, %s2303
      $region44: #{tpu_custom_call.1} parent=39 // pred_fallthru
        _
    $region40: #{tpu_custom_call.1} parent=5 // pred_fallthru
      _
  $region6: #{tpu_custom_call.1} parent=0 // loop_footer
    %s13 = sadd.s32 1, %s9
  $region7: #{tpu_custom_call.1} parent=0 // loop_footer_branch
    %8 = sbr.rel target = $region3
  $region8: #{tpu_custom_call.1} parent=0 // loop_exit
    _

</llo_original>
